<compile_context>
chip_gen: v6e
topology: v6e:2x2x1
jax: 0.10.0
libtpu: 0.0.40
codegen_flags: <defaults>
</compile_context>

<pallas_src>
import jax
import jax.numpy as jnp
from jax import lax
from jax.experimental import pallas as pl
from jax.experimental.pallas import tpu as pltpu


def ealstm_model_kernel(xd_ref, xs_ref, wih_ref, whh_ref, wsh_ref, b_ref, bs_ref,
                        fcw_ref, fcb_ref, out_ref, hn_ref, cn_ref):
    TB = xs_ref.shape[0]            # batch tile (multiple of 8 sublanes)
    H = whh_ref.shape[0]            # hidden size
    T = hn_ref.shape[1] // H        # timesteps (static)

    # Static input gate, computed once per batch tile: i = sigmoid(x_s @ W_sh + b_s)
    i_gate = jax.nn.sigmoid(
        jnp.dot(xs_ref[...], wsh_ref[...], preferred_element_type=jnp.float32)
        + bs_ref[...])

    # Input projection for ALL timesteps in a single matmul (+ one bias
    # broadcast), kept resident as a VMEM-local value.  xd_ref is laid out
    # time-major within the batch tile: row t*TB + j  <->  (time t, batch j).
    xproj = (jnp.dot(xd_ref[...], wih_ref[...],
                     preferred_element_type=jnp.float32)
             + b_ref[...])                                   # [T*TB, 3H_pad]

    h = jnp.zeros((TB, H), jnp.float32)
    c = jnp.zeros((TB, H), jnp.float32)

    # Fully unrolled recurrence (T is small & static) -> static slices only;
    # the serial chain per step is just h @ W_hh + elementwise cell update.
    for t in range(T):
        gates = xproj[t * TB:(t + 1) * TB, :] + jnp.dot(
            h, whh_ref[...], preferred_element_type=jnp.float32)
        f = gates[:, 0 * H:1 * H]                            # forget
        o = gates[:, 1 * H:2 * H]                            # output
        g = gates[:, 2 * H:3 * H]                            # cell candidate
        c = jax.nn.sigmoid(f) * c + i_gate * jnp.tanh(g)
        h = jax.nn.sigmoid(o) * jnp.tanh(c)
        # Lane-dense writeback: [B_pad, T*H] slab, static lane offsets.
        hn_ref[:, t * H:(t + 1) * H] = h
        cn_ref[:, t * H:(t + 1) * H] = c

    # FC head on the last hidden state (dropout p=0.0 -> identity).
    out_ref[...] = (jnp.dot(h, fcw_ref[...],
                            preferred_element_type=jnp.float32) + fcb_ref[...])


def ealstm_model(x_d, x_s, params):
    """x_d: [B, T, D_dyn], x_s: [B, D_stat] -> (out [B,1], h_n [B,T,H], c_n [B,T,H])"""
    f32 = jnp.float32
    B, T, Dd = x_d.shape
    Ds = x_s.shape[1]
    H = params["w_hh"].shape[0]
    G = 3 * H
    Gp = ((G + 127) // 128) * 128          # pad gate columns to 128-lane multiple

    # Batch tile: multiple of 8 sublanes, capped at 128.
    TILE_B = min(((B + 7) // 8) * 8, 128)
    nb = pl.cdiv(B, TILE_B)
    Bp = nb * TILE_B

    # --- prepare inputs (small arrays; hn/cn - the big outputs - need no transpose) ---
    xd = jnp.pad(x_d.astype(f32), ((0, Bp - B), (0, 0), (0, 0)))        # [Bp,T,Dd]
    # per-tile time-major layout: [nb, T*TILE_B, Dd], row t*TILE_B + j
    xd = xd.reshape(nb, TILE_B, T, Dd).transpose(0, 2, 1, 3).reshape(nb, T * TILE_B, Dd)

    xs = jnp.pad(x_s.astype(f32), ((0, Bp - B), (0, 0)))                # [Bp,Ds]

    w_ih = jnp.pad(params["w_ih"].astype(f32), ((0, 0), (0, Gp - G)))   # [Dd,Gp]
    w_hh = jnp.pad(params["w_hh"].astype(f32), ((0, 0), (0, Gp - G)))   # [H ,Gp]
    bias = jnp.pad(params["bias"].astype(f32), ((0, 0), (0, Gp - G)))   # [1 ,Gp]
    w_sh = params["w_sh"].astype(f32)                                   # [Ds,H]
    bias_s = params["bias_s"].astype(f32)                               # [1 ,H]
    fc_w = params["fc_w"].astype(f32)                                   # [H ,1]
    fc_b = params["fc_b"].astype(f32)                                   # [1 ,1]

    def const_spec(shape):
        # weights: same block every grid step -> stays resident, no re-DMA
        return pl.BlockSpec(shape, lambda i, _n=len(shape): (0,) * _n)

    out, hn_flat, cn_flat = pl.pallas_call(
        ealstm_model_kernel,
        grid=(nb,),
        in_specs=[
            pl.BlockSpec((None, T * TILE_B, Dd), lambda i: (i, 0, 0)),  # x_d tile
            pl.BlockSpec((TILE_B, Ds), lambda i: (i, 0)),               # x_s tile
            const_spec(w_ih.shape),
            const_spec(w_hh.shape),
            const_spec(w_sh.shape),
            const_spec(bias.shape),
            const_spec(bias_s.shape),
            const_spec(fc_w.shape),
            const_spec(fc_b.shape),
        ],
        out_specs=[
            pl.BlockSpec((TILE_B, 1), lambda i: (i, 0)),                # out
            pl.BlockSpec((TILE_B, T * H), lambda i: (i, 0)),            # h_n (lane-dense)
            pl.BlockSpec((TILE_B, T * H), lambda i: (i, 0)),            # c_n (lane-dense)
        ],
        out_shape=(
            jax.ShapeDtypeStruct((Bp, 1), f32),
            jax.ShapeDtypeStruct((Bp, T * H), f32),
            jax.ShapeDtypeStruct((Bp, T * H), f32),
        ),
        compiler_params=pltpu.CompilerParams(
            dimension_semantics=("parallel",)),
    )(xd, xs, w_ih, w_hh, w_sh, bias, bias_s, fc_w, fc_b)

    # Free reshapes (row-major) + drop batch padding; no transposes needed.
    h_n = hn_flat.reshape(Bp, T, H)[:B]
    c_n = cn_flat.reshape(Bp, T, H)[:B]
    return out[:B], h_n, c_n


def ealstm_model_ref(x_d, x_s, params):
    """Pure-JAX reference of the PyTorch forward, for correctness checking."""
    B, T, Dd = x_d.shape
    H = params["w_hh"].shape[0]
    i_gate = jax.nn.sigmoid(x_s @ params["w_sh"] + params["bias_s"])
    h = jnp.zeros((B, H), jnp.float32)
    c = jnp.zeros((B, H), jnp.float32)
    hs, cs = [], []
    for t in range(T):
        gates = h @ params["w_hh"] + params["bias"] + x_d[:, t, :] @ params["w_ih"]
        f, o, g = gates[:, :H], gates[:, H:2 * H], gates[:, 2 * H:]
        c = jax.nn.sigmoid(f) * c + i_gate * jnp.tanh(g)
        h = jax.nn.sigmoid(o) * jnp.tanh(c)
        hs.append(h)
        cs.append(c)
    h_n = jnp.stack(hs, axis=1)
    c_n = jnp.stack(cs, axis=1)
    out = h_n[:, -1, :] @ params["fc_w"] + params["fc_b"]
    return out, h_n, c_n


def make_params(key, input_size_dyn, input_size_stat, hidden_size,
                initial_forget_bias=5):
    ks = jax.random.split(key, 4)
    H = hidden_size
    params = {
        "w_ih": 0.1 * jax.random.normal(ks[0], (input_size_dyn, 3 * H), jnp.float32),
        "w_hh": 0.1 * jax.random.normal(ks[1], (H, 3 * H), jnp.float32),
        "w_sh": 0.1 * jax.random.normal(ks[2], (input_size_stat, H), jnp.float32),
        # bias layout [f | o | g]; forget chunk initialised to initial_forget_bias
        "bias": jnp.zeros((1, 3 * H), jnp.float32).at[:, :H].set(
            float(initial_forget_bias)),
        "bias_s": jnp.zeros((1, H), jnp.float32),
        "fc_w": 0.1 * jax.random.normal(ks[3], (H, 1), jnp.float32),
        "fc_b": jnp.zeros((1, 1), jnp.float32),
    }
    return params


if __name__ == "__main__":
    B, T = 2, 8
    INPUT_SIZE_DYN, INPUT_SIZE_STAT, HIDDEN = 4, 5, 32

    key = jax.random.PRNGKey(0)
    k_xd, k_xs, k_p = jax.random.split(key, 3)
    x_d = jax.random.normal(k_xd, (B, T, INPUT_SIZE_DYN), jnp.float32)
    x_s = jax.random.normal(k_xs, (B, INPUT_SIZE_STAT), jnp.float32)
    params = make_params(k_p, INPUT_SIZE_DYN, INPUT_SIZE_STAT, HIDDEN,
                         initial_forget_bias=5)

    out, h_n, c_n = jax.block_until_ready(ealstm_model(x_d, x_s, params))

    out_r, h_n_r, c_n_r = ealstm_model_ref(x_d, x_s, params)
    assert out.shape == (B, 1) and h_n.shape == (B, T, HIDDEN) and c_n.shape == (B, T, HIDDEN)
    assert jnp.allclose(out, out_r, atol=1e-5)
    assert jnp.allclose(h_n, h_n_r, atol=1e-5)
    assert jnp.allclose(c_n, c_n_r, atol=1e-5)

    print("KERNEL_OK")
</pallas_src>

<mosaic_0001>
module attributes {stable_mosaic.version = 11 : i64} {
  func.func @ealstm_model_kernel(%arg0: i32, %arg1: memref<1x64x4xf32, #tpu.memory_space<vmem>>, %arg2: memref<8x5xf32, #tpu.memory_space<vmem>>, %arg3: memref<4x128xf32, #tpu.memory_space<vmem>>, %arg4: memref<32x128xf32, #tpu.memory_space<vmem>>, %arg5: memref<5x32xf32, #tpu.memory_space<vmem>>, %arg6: memref<1x128xf32, #tpu.memory_space<vmem>>, %arg7: memref<1x32xf32, #tpu.memory_space<vmem>>, %arg8: memref<32x1xf32, #tpu.memory_space<vmem>>, %arg9: memref<1x1xf32, #tpu.memory_space<vmem>>, %arg10: memref<8x1xf32, #tpu.memory_space<vmem>>, %arg11: memref<8x256xf32, #tpu.memory_space<vmem>>, %arg12: memref<8x256xf32, #tpu.memory_space<vmem>>) attributes {dimension_semantics = [#tpu.dimension_semantics<parallel>], iteration_bounds = array<i64: 1>, scalar_prefetch = 0 : i64, scratch_operands = 0 : i64, tpu.core_type = #tpu.core_type<tc>, window_params = [{transform_indices = @transform_0, window_bounds = array<i64: 1, 64, 4>}, {transform_indices = @transform_1, window_bounds = array<i64: 8, 5>}, {pipeline_mode = #tpu.pipeline_mode<synchronous>, transform_indices = @transform_2, window_bounds = array<i64: 4, 128>}, {pipeline_mode = #tpu.pipeline_mode<synchronous>, transform_indices = @transform_3, window_bounds = array<i64: 32, 128>}, {pipeline_mode = #tpu.pipeline_mode<synchronous>, transform_indices = @transform_4, window_bounds = array<i64: 5, 32>}, {pipeline_mode = #tpu.pipeline_mode<synchronous>, transform_indices = @transform_5, window_bounds = array<i64: 1, 128>}, {pipeline_mode = #tpu.pipeline_mode<synchronous>, transform_indices = @transform_6, window_bounds = array<i64: 1, 32>}, {pipeline_mode = #tpu.pipeline_mode<synchronous>, transform_indices = @transform_7, window_bounds = array<i64: 32, 1>}, {pipeline_mode = #tpu.pipeline_mode<synchronous>, transform_indices = @transform_8, window_bounds = array<i64: 1, 1>}, {transform_indices = @transform_9, window_bounds = array<i64: 8, 1>}, {transform_indices = @transform_10, window_bounds = array<i64: 8, 256>}, {transform_indices = @transform_11, window_bounds = array<i64: 8, 256>}]} {
    %c0 = arith.constant 0 : index
    %c0_0 = arith.constant 0 : index
    %0 = vector.load %arg2[%c0, %c0_0] : memref<8x5xf32, #tpu.memory_space<vmem>>, vector<8x5xf32>
    %c0_1 = arith.constant 0 : index
    %c0_2 = arith.constant 0 : index
    %1 = vector.load %arg5[%c0_1, %c0_2] : memref<5x32xf32, #tpu.memory_space<vmem>>, vector<5x32xf32>
    %cst = arith.constant dense<0.000000e+00> : vector<8x32xf32>
    %2 = tpu.matmul %0, %1, %cst {dimension_numbers = #tpu.dot_dimension_numbers<[1], [0], [0], [1], [0, 0, 1, 1], [], []>} : vector<8x5xf32>, vector<5x32xf32>, vector<8x32xf32> -> vector<8x32xf32>
    %c0_3 = arith.constant 0 : index
    %c0_4 = arith.constant 0 : index
    %3 = vector.load %arg7[%c0_3, %c0_4] : memref<1x32xf32, #tpu.memory_space<vmem>>, vector<1x32xf32>
    %4 = vector.broadcast %3 : vector<1x32xf32> to vector<8x32xf32>
    %5 = arith.addf %2, %4 : vector<8x32xf32>
    %6 = arith.negf %5 : vector<8x32xf32>
    %7 = math.exp %6 : vector<8x32xf32>
    %cst_5 = arith.constant 1.000000e+00 : f32
    %8 = vector.broadcast %cst_5 : f32 to vector<8x32xf32>
    %9 = arith.addf %8, %7 : vector<8x32xf32>
    %10 = arith.divf %8, %9 : vector<8x32xf32>
    %c0_6 = arith.constant 0 : index
    %c0_7 = arith.constant 0 : index
    %c0_8 = arith.constant 0 : index
    %11 = vector.load %arg1[%c0_6, %c0_7, %c0_8] : memref<1x64x4xf32, #tpu.memory_space<vmem>>, vector<1x64x4xf32>
    %12 = vector.shape_cast %11 : vector<1x64x4xf32> to vector<64x4xf32>
    %c0_9 = arith.constant 0 : index
    %c0_10 = arith.constant 0 : index
    %13 = vector.load %arg3[%c0_9, %c0_10] : memref<4x128xf32, #tpu.memory_space<vmem>>, vector<4x128xf32>
    %cst_11 = arith.constant dense<0.000000e+00> : vector<64x128xf32>
    %14 = tpu.matmul %12, %13, %cst_11 {dimension_numbers = #tpu.dot_dimension_numbers<[1], [0], [0], [1], [0, 0, 1, 1], [], []>} : vector<64x4xf32>, vector<4x128xf32>, vector<64x128xf32> -> vector<64x128xf32>
    %c0_12 = arith.constant 0 : index
    %c0_13 = arith.constant 0 : index
    %15 = vector.load %arg6[%c0_12, %c0_13] : memref<1x128xf32, #tpu.memory_space<vmem>>, vector<1x128xf32>
    %16 = vector.broadcast %15 : vector<1x128xf32> to vector<64x128xf32>
    %17 = arith.addf %14, %16 : vector<64x128xf32>
    %cst_14 = arith.constant 0.000000e+00 : f32
    %18 = vector.broadcast %cst_14 : f32 to vector<8x32xf32>
    %cst_15 = arith.constant 0.000000e+00 : f32
    %19 = vector.broadcast %cst_15 : f32 to vector<8x32xf32>
    %20 = vector.extract_strided_slice %17 {offsets = [0, 0], sizes = [8, 128], strides = [1, 1]} : vector<64x128xf32> to vector<8x128xf32>
    %c0_16 = arith.constant 0 : index
    %c0_17 = arith.constant 0 : index
    %21 = vector.load %arg4[%c0_16, %c0_17] : memref<32x128xf32, #tpu.memory_space<vmem>>, vector<32x128xf32>
    %cst_18 = arith.constant dense<0.000000e+00> : vector<8x128xf32>
    %22 = tpu.matmul %18, %21, %cst_18 {dimension_numbers = #tpu.dot_dimension_numbers<[1], [0], [0], [1], [0, 0, 1, 1], [], []>} : vector<8x32xf32>, vector<32x128xf32>, vector<8x128xf32> -> vector<8x128xf32>
    %23 = arith.addf %20, %22 : vector<8x128xf32>
    %24 = vector.extract_strided_slice %23 {offsets = [0, 0], sizes = [8, 32], strides = [1, 1]} : vector<8x128xf32> to vector<8x32xf32>
    %25 = vector.extract_strided_slice %23 {offsets = [0, 32], sizes = [8, 32], strides = [1, 1]} : vector<8x128xf32> to vector<8x32xf32>
    %26 = vector.extract_strided_slice %23 {offsets = [0, 64], sizes = [8, 32], strides = [1, 1]} : vector<8x128xf32> to vector<8x32xf32>
    %27 = arith.negf %24 : vector<8x32xf32>
    %28 = math.exp %27 : vector<8x32xf32>
    %cst_19 = arith.constant 1.000000e+00 : f32
    %29 = vector.broadcast %cst_19 : f32 to vector<8x32xf32>
    %30 = arith.addf %29, %28 : vector<8x32xf32>
    %31 = arith.divf %29, %30 : vector<8x32xf32>
    %32 = arith.mulf %31, %19 : vector<8x32xf32>
    %33 = math.tanh %26 : vector<8x32xf32>
    %34 = arith.mulf %10, %33 : vector<8x32xf32>
    %35 = arith.addf %32, %34 : vector<8x32xf32>
    %36 = arith.negf %25 : vector<8x32xf32>
    %37 = math.exp %36 : vector<8x32xf32>
    %cst_20 = arith.constant 1.000000e+00 : f32
    %38 = vector.broadcast %cst_20 : f32 to vector<8x32xf32>
    %39 = arith.addf %38, %37 : vector<8x32xf32>
    %40 = arith.divf %38, %39 : vector<8x32xf32>
    %41 = math.tanh %35 : vector<8x32xf32>
    %42 = arith.mulf %40, %41 : vector<8x32xf32>
    %c0_21 = arith.constant 0 : index
    %c0_22 = arith.constant 0 : index
    %43 = vector.load %arg11[%c0_21, %c0_22] : memref<8x256xf32, #tpu.memory_space<vmem>>, vector<8x32xf32>
    tpu.vector_store %arg11[%c0_21, %c0_22], %42 {strides = array<i32>} : memref<8x256xf32, #tpu.memory_space<vmem>>, vector<8x32xf32>,
    %c0_23 = arith.constant 0 : index
    %c0_24 = arith.constant 0 : index
    %44 = vector.load %arg12[%c0_23, %c0_24] : memref<8x256xf32, #tpu.memory_space<vmem>>, vector<8x32xf32>
    tpu.vector_store %arg12[%c0_23, %c0_24], %35 {strides = array<i32>} : memref<8x256xf32, #tpu.memory_space<vmem>>, vector<8x32xf32>,
    %45 = vector.extract_strided_slice %17 {offsets = [8, 0], sizes = [8, 128], strides = [1, 1]} : vector<64x128xf32> to vector<8x128xf32>
    %c0_25 = arith.constant 0 : index
    %c0_26 = arith.constant 0 : index
    %46 = vector.load %arg4[%c0_25, %c0_26] : memref<32x128xf32, #tpu.memory_space<vmem>>, vector<32x128xf32>
    %cst_27 = arith.constant dense<0.000000e+00> : vector<8x128xf32>
    %47 = tpu.matmul %42, %46, %cst_27 {dimension_numbers = #tpu.dot_dimension_numbers<[1], [0], [0], [1], [0, 0, 1, 1], [], []>} : vector<8x32xf32>, vector<32x128xf32>, vector<8x128xf32> -> vector<8x128xf32>
    %48 = arith.addf %45, %47 : vector<8x128xf32>
    %49 = vector.extract_strided_slice %48 {offsets = [0, 0], sizes = [8, 32], strides = [1, 1]} : vector<8x128xf32> to vector<8x32xf32>
    %50 = vector.extract_strided_slice %48 {offsets = [0, 32], sizes = [8, 32], strides = [1, 1]} : vector<8x128xf32> to vector<8x32xf32>
    %51 = vector.extract_strided_slice %48 {offsets = [0, 64], sizes = [8, 32], strides = [1, 1]} : vector<8x128xf32> to vector<8x32xf32>
    %52 = arith.negf %49 : vector<8x32xf32>
    %53 = math.exp %52 : vector<8x32xf32>
    %cst_28 = arith.constant 1.000000e+00 : f32
    %54 = vector.broadcast %cst_28 : f32 to vector<8x32xf32>
    %55 = arith.addf %54, %53 : vector<8x32xf32>
    %56 = arith.divf %54, %55 : vector<8x32xf32>
    %57 = arith.mulf %56, %35 : vector<8x32xf32>
    %58 = math.tanh %51 : vector<8x32xf32>
    %59 = arith.mulf %10, %58 : vector<8x32xf32>
    %60 = arith.addf %57, %59 : vector<8x32xf32>
    %61 = arith.negf %50 : vector<8x32xf32>
    %62 = math.exp %61 : vector<8x32xf32>
    %cst_29 = arith.constant 1.000000e+00 : f32
    %63 = vector.broadcast %cst_29 : f32 to vector<8x32xf32>
    %64 = arith.addf %63, %62 : vector<8x32xf32>
    %65 = arith.divf %63, %64 : vector<8x32xf32>
    %66 = math.tanh %60 : vector<8x32xf32>
    %67 = arith.mulf %65, %66 : vector<8x32xf32>
    %c0_30 = arith.constant 0 : index
    %c32 = arith.constant 32 : index
    %68 = vector.load %arg11[%c0_30, %c32] : memref<8x256xf32, #tpu.memory_space<vmem>>, vector<8x32xf32>
    tpu.vector_store %arg11[%c0_30, %c32], %67 {strides = array<i32>} : memref<8x256xf32, #tpu.memory_space<vmem>>, vector<8x32xf32>,
    %c0_31 = arith.constant 0 : index
    %c32_32 = arith.constant 32 : index
    %69 = vector.load %arg12[%c0_31, %c32_32] : memref<8x256xf32, #tpu.memory_space<vmem>>, vector<8x32xf32>
    tpu.vector_store %arg12[%c0_31, %c32_32], %60 {strides = array<i32>} : memref<8x256xf32, #tpu.memory_space<vmem>>, vector<8x32xf32>,
    %70 = vector.extract_strided_slice %17 {offsets = [16, 0], sizes = [8, 128], strides = [1, 1]} : vector<64x128xf32> to vector<8x128xf32>
    %c0_33 = arith.constant 0 : index
    %c0_34 = arith.constant 0 : index
    %71 = vector.load %arg4[%c0_33, %c0_34] : memref<32x128xf32, #tpu.memory_space<vmem>>, vector<32x128xf32>
    %cst_35 = arith.constant dense<0.000000e+00> : vector<8x128xf32>
    %72 = tpu.matmul %67, %71, %cst_35 {dimension_numbers = #tpu.dot_dimension_numbers<[1], [0], [0], [1], [0, 0, 1, 1], [], []>} : vector<8x32xf32>, vector<32x128xf32>, vector<8x128xf32> -> vector<8x128xf32>
    %73 = arith.addf %70, %72 : vector<8x128xf32>
    %74 = vector.extract_strided_slice %73 {offsets = [0, 0], sizes = [8, 32], strides = [1, 1]} : vector<8x128xf32> to vector<8x32xf32>
    %75 = vector.extract_strided_slice %73 {offsets = [0, 32], sizes = [8, 32], strides = [1, 1]} : vector<8x128xf32> to vector<8x32xf32>
    %76 = vector.extract_strided_slice %73 {offsets = [0, 64], sizes = [8, 32], strides = [1, 1]} : vector<8x128xf32> to vector<8x32xf32>
    %77 = arith.negf %74 : vector<8x32xf32>
    %78 = math.exp %77 : vector<8x32xf32>
    %cst_36 = arith.constant 1.000000e+00 : f32
    %79 = vector.broadcast %cst_36 : f32 to vector<8x32xf32>
    %80 = arith.addf %79, %78 : vector<8x32xf32>
    %81 = arith.divf %79, %80 : vector<8x32xf32>
    %82 = arith.mulf %81, %60 : vector<8x32xf32>
    %83 = math.tanh %76 : vector<8x32xf32>
    %84 = arith.mulf %10, %83 : vector<8x32xf32>
    %85 = arith.addf %82, %84 : vector<8x32xf32>
    %86 = arith.negf %75 : vector<8x32xf32>
    %87 = math.exp %86 : vector<8x32xf32>
    %cst_37 = arith.constant 1.000000e+00 : f32
    %88 = vector.broadcast %cst_37 : f32 to vector<8x32xf32>
    %89 = arith.addf %88, %87 : vector<8x32xf32>
    %90 = arith.divf %88, %89 : vector<8x32xf32>
    %91 = math.tanh %85 : vector<8x32xf32>
    %92 = arith.mulf %90, %91 : vector<8x32xf32>
    %c0_38 = arith.constant 0 : index
    %c64 = arith.constant 64 : index
    %93 = vector.load %arg11[%c0_38, %c64] : memref<8x256xf32, #tpu.memory_space<vmem>>, vector<8x32xf32>
    tpu.vector_store %arg11[%c0_38, %c64], %92 {strides = array<i32>} : memref<8x256xf32, #tpu.memory_space<vmem>>, vector<8x32xf32>,
    %c0_39 = arith.constant 0 : index
    %c64_40 = arith.constant 64 : index
    %94 = vector.load %arg12[%c0_39, %c64_40] : memref<8x256xf32, #tpu.memory_space<vmem>>, vector<8x32xf32>
    tpu.vector_store %arg12[%c0_39, %c64_40], %85 {strides = array<i32>} : memref<8x256xf32, #tpu.memory_space<vmem>>, vector<8x32xf32>,
    %95 = vector.extract_strided_slice %17 {offsets = [24, 0], sizes = [8, 128], strides = [1, 1]} : vector<64x128xf32> to vector<8x128xf32>
    %c0_41 = arith.constant 0 : index
    %c0_42 = arith.constant 0 : index
    %96 = vector.load %arg4[%c0_41, %c0_42] : memref<32x128xf32, #tpu.memory_space<vmem>>, vector<32x128xf32>
    %cst_43 = arith.constant dense<0.000000e+00> : vector<8x128xf32>
    %97 = tpu.matmul %92, %96, %cst_43 {dimension_numbers = #tpu.dot_dimension_numbers<[1], [0], [0], [1], [0, 0, 1, 1], [], []>} : vector<8x32xf32>, vector<32x128xf32>, vector<8x128xf32> -> vector<8x128xf32>
    %98 = arith.addf %95, %97 : vector<8x128xf32>
    %99 = vector.extract_strided_slice %98 {offsets = [0, 0], sizes = [8, 32], strides = [1, 1]} : vector<8x128xf32> to vector<8x32xf32>
    %100 = vector.extract_strided_slice %98 {offsets = [0, 32], sizes = [8, 32], strides = [1, 1]} : vector<8x128xf32> to vector<8x32xf32>
    %101 = vector.extract_strided_slice %98 {offsets = [0, 64], sizes = [8, 32], strides = [1, 1]} : vector<8x128xf32> to vector<8x32xf32>
    %102 = arith.negf %99 : vector<8x32xf32>
    %103 = math.exp %102 : vector<8x32xf32>
    %cst_44 = arith.constant 1.000000e+00 : f32
    %104 = vector.broadcast %cst_44 : f32 to vector<8x32xf32>
    %105 = arith.addf %104, %103 : vector<8x32xf32>
    %106 = arith.divf %104, %105 : vector<8x32xf32>
    %107 = arith.mulf %106, %85 : vector<8x32xf32>
    %108 = math.tanh %101 : vector<8x32xf32>
    %109 = arith.mulf %10, %108 : vector<8x32xf32>
    %110 = arith.addf %107, %109 : vector<8x32xf32>
    %111 = arith.negf %100 : vector<8x32xf32>
    %112 = math.exp %111 : vector<8x32xf32>
    %cst_45 = arith.constant 1.000000e+00 : f32
    %113 = vector.broadcast %cst_45 : f32 to vector<8x32xf32>
    %114 = arith.addf %113, %112 : vector<8x32xf32>
    %115 = arith.divf %113, %114 : vector<8x32xf32>
    %116 = math.tanh %110 : vector<8x32xf32>
    %117 = arith.mulf %115, %116 : vector<8x32xf32>
    %c0_46 = arith.constant 0 : index
    %c96 = arith.constant 96 : index
    %118 = vector.load %arg11[%c0_46, %c96] : memref<8x256xf32, #tpu.memory_space<vmem>>, vector<8x32xf32>
    tpu.vector_store %arg11[%c0_46, %c96], %117 {strides = array<i32>} : memref<8x256xf32, #tpu.memory_space<vmem>>, vector<8x32xf32>,
    %c0_47 = arith.constant 0 : index
    %c96_48 = arith.constant 96 : index
    %119 = vector.load %arg12[%c0_47, %c96_48] : memref<8x256xf32, #tpu.memory_space<vmem>>, vector<8x32xf32>
    tpu.vector_store %arg12[%c0_47, %c96_48], %110 {strides = array<i32>} : memref<8x256xf32, #tpu.memory_space<vmem>>, vector<8x32xf32>,
    %120 = vector.extract_strided_slice %17 {offsets = [32, 0], sizes = [8, 128], strides = [1, 1]} : vector<64x128xf32> to vector<8x128xf32>
    %c0_49 = arith.constant 0 : index
    %c0_50 = arith.constant 0 : index
    %121 = vector.load %arg4[%c0_49, %c0_50] : memref<32x128xf32, #tpu.memory_space<vmem>>, vector<32x128xf32>
    %cst_51 = arith.constant dense<0.000000e+00> : vector<8x128xf32>
    %122 = tpu.matmul %117, %121, %cst_51 {dimension_numbers = #tpu.dot_dimension_numbers<[1], [0], [0], [1], [0, 0, 1, 1], [], []>} : vector<8x32xf32>, vector<32x128xf32>, vector<8x128xf32> -> vector<8x128xf32>
    %123 = arith.addf %120, %122 : vector<8x128xf32>
    %124 = vector.extract_strided_slice %123 {offsets = [0, 0], sizes = [8, 32], strides = [1, 1]} : vector<8x128xf32> to vector<8x32xf32>
    %125 = vector.extract_strided_slice %123 {offsets = [0, 32], sizes = [8, 32], strides = [1, 1]} : vector<8x128xf32> to vector<8x32xf32>
    %126 = vector.extract_strided_slice %123 {offsets = [0, 64], sizes = [8, 32], strides = [1, 1]} : vector<8x128xf32> to vector<8x32xf32>
    %127 = arith.negf %124 : vector<8x32xf32>
    %128 = math.exp %127 : vector<8x32xf32>
    %cst_52 = arith.constant 1.000000e+00 : f32
    %129 = vector.broadcast %cst_52 : f32 to vector<8x32xf32>
    %130 = arith.addf %129, %128 : vector<8x32xf32>
    %131 = arith.divf %129, %130 : vector<8x32xf32>
    %132 = arith.mulf %131, %110 : vector<8x32xf32>
    %133 = math.tanh %126 : vector<8x32xf32>
    %134 = arith.mulf %10, %133 : vector<8x32xf32>
    %135 = arith.addf %132, %134 : vector<8x32xf32>
    %136 = arith.negf %125 : vector<8x32xf32>
    %137 = math.exp %136 : vector<8x32xf32>
    %cst_53 = arith.constant 1.000000e+00 : f32
    %138 = vector.broadcast %cst_53 : f32 to vector<8x32xf32>
    %139 = arith.addf %138, %137 : vector<8x32xf32>
    %140 = arith.divf %138, %139 : vector<8x32xf32>
    %141 = math.tanh %135 : vector<8x32xf32>
    %142 = arith.mulf %140, %141 : vector<8x32xf32>
    %c0_54 = arith.constant 0 : index
    %c128 = arith.constant 128 : index
    %143 = vector.load %arg11[%c0_54, %c128] : memref<8x256xf32, #tpu.memory_space<vmem>>, vector<8x32xf32>
    tpu.vector_store %arg11[%c0_54, %c128], %142 {strides = array<i32>} : memref<8x256xf32, #tpu.memory_space<vmem>>, vector<8x32xf32>,
    %c0_55 = arith.constant 0 : index
    %c128_56 = arith.constant 128 : index
    %144 = vector.load %arg12[%c0_55, %c128_56] : memref<8x256xf32, #tpu.memory_space<vmem>>, vector<8x32xf32>
    tpu.vector_store %arg12[%c0_55, %c128_56], %135 {strides = array<i32>} : memref<8x256xf32, #tpu.memory_space<vmem>>, vector<8x32xf32>,
    %145 = vector.extract_strided_slice %17 {offsets = [40, 0], sizes = [8, 128], strides = [1, 1]} : vector<64x128xf32> to vector<8x128xf32>
    %c0_57 = arith.constant 0 : index
    %c0_58 = arith.constant 0 : index
    %146 = vector.load %arg4[%c0_57, %c0_58] : memref<32x128xf32, #tpu.memory_space<vmem>>, vector<32x128xf32>
    %cst_59 = arith.constant dense<0.000000e+00> : vector<8x128xf32>
    %147 = tpu.matmul %142, %146, %cst_59 {dimension_numbers = #tpu.dot_dimension_numbers<[1], [0], [0], [1], [0, 0, 1, 1], [], []>} : vector<8x32xf32>, vector<32x128xf32>, vector<8x128xf32> -> vector<8x128xf32>
    %148 = arith.addf %145, %147 : vector<8x128xf32>
    %149 = vector.extract_strided_slice %148 {offsets = [0, 0], sizes = [8, 32], strides = [1, 1]} : vector<8x128xf32> to vector<8x32xf32>
    %150 = vector.extract_strided_slice %148 {offsets = [0, 32], sizes = [8, 32], strides = [1, 1]} : vector<8x128xf32> to vector<8x32xf32>
    %151 = vector.extract_strided_slice %148 {offsets = [0, 64], sizes = [8, 32], strides = [1, 1]} : vector<8x128xf32> to vector<8x32xf32>
    %152 = arith.negf %149 : vector<8x32xf32>
    %153 = math.exp %152 : vector<8x32xf32>
    %cst_60 = arith.constant 1.000000e+00 : f32
    %154 = vector.broadcast %cst_60 : f32 to vector<8x32xf32>
    %155 = arith.addf %154, %153 : vector<8x32xf32>
    %156 = arith.divf %154, %155 : vector<8x32xf32>
    %157 = arith.mulf %156, %135 : vector<8x32xf32>
    %158 = math.tanh %151 : vector<8x32xf32>
    %159 = arith.mulf %10, %158 : vector<8x32xf32>
    %160 = arith.addf %157, %159 : vector<8x32xf32>
    %161 = arith.negf %150 : vector<8x32xf32>
    %162 = math.exp %161 : vector<8x32xf32>
    %cst_61 = arith.constant 1.000000e+00 : f32
    %163 = vector.broadcast %cst_61 : f32 to vector<8x32xf32>
    %164 = arith.addf %163, %162 : vector<8x32xf32>
    %165 = arith.divf %163, %164 : vector<8x32xf32>
    %166 = math.tanh %160 : vector<8x32xf32>
    %167 = arith.mulf %165, %166 : vector<8x32xf32>
    %c0_62 = arith.constant 0 : index
    %c160 = arith.constant 160 : index
    %168 = vector.load %arg11[%c0_62, %c160] : memref<8x256xf32, #tpu.memory_space<vmem>>, vector<8x32xf32>
    tpu.vector_store %arg11[%c0_62, %c160], %167 {strides = array<i32>} : memref<8x256xf32, #tpu.memory_space<vmem>>, vector<8x32xf32>,
    %c0_63 = arith.constant 0 : index
    %c160_64 = arith.constant 160 : index
    %169 = vector.load %arg12[%c0_63, %c160_64] : memref<8x256xf32, #tpu.memory_space<vmem>>, vector<8x32xf32>
    tpu.vector_store %arg12[%c0_63, %c160_64], %160 {strides = array<i32>} : memref<8x256xf32, #tpu.memory_space<vmem>>, vector<8x32xf32>,
    %170 = vector.extract_strided_slice %17 {offsets = [48, 0], sizes = [8, 128], strides = [1, 1]} : vector<64x128xf32> to vector<8x128xf32>
    %c0_65 = arith.constant 0 : index
    %c0_66 = arith.constant 0 : index
    %171 = vector.load %arg4[%c0_65, %c0_66] : memref<32x128xf32, #tpu.memory_space<vmem>>, vector<32x128xf32>
    %cst_67 = arith.constant dense<0.000000e+00> : vector<8x128xf32>
    %172 = tpu.matmul %167, %171, %cst_67 {dimension_numbers = #tpu.dot_dimension_numbers<[1], [0], [0], [1], [0, 0, 1, 1], [], []>} : vector<8x32xf32>, vector<32x128xf32>, vector<8x128xf32> -> vector<8x128xf32>
    %173 = arith.addf %170, %172 : vector<8x128xf32>
    %174 = vector.extract_strided_slice %173 {offsets = [0, 0], sizes = [8, 32], strides = [1, 1]} : vector<8x128xf32> to vector<8x32xf32>
    %175 = vector.extract_strided_slice %173 {offsets = [0, 32], sizes = [8, 32], strides = [1, 1]} : vector<8x128xf32> to vector<8x32xf32>
    %176 = vector.extract_strided_slice %173 {offsets = [0, 64], sizes = [8, 32], strides = [1, 1]} : vector<8x128xf32> to vector<8x32xf32>
    %177 = arith.negf %174 : vector<8x32xf32>
    %178 = math.exp %177 : vector<8x32xf32>
    %cst_68 = arith.constant 1.000000e+00 : f32
    %179 = vector.broadcast %cst_68 : f32 to vector<8x32xf32>
    %180 = arith.addf %179, %178 : vector<8x32xf32>
    %181 = arith.divf %179, %180 : vector<8x32xf32>
    %182 = arith.mulf %181, %160 : vector<8x32xf32>
    %183 = math.tanh %176 : vector<8x32xf32>
    %184 = arith.mulf %10, %183 : vector<8x32xf32>
    %185 = arith.addf %182, %184 : vector<8x32xf32>
    %186 = arith.negf %175 : vector<8x32xf32>
    %187 = math.exp %186 : vector<8x32xf32>
    %cst_69 = arith.constant 1.000000e+00 : f32
    %188 = vector.broadcast %cst_69 : f32 to vector<8x32xf32>
    %189 = arith.addf %188, %187 : vector<8x32xf32>
    %190 = arith.divf %188, %189 : vector<8x32xf32>
    %191 = math.tanh %185 : vector<8x32xf32>
    %192 = arith.mulf %190, %191 : vector<8x32xf32>
    %c0_70 = arith.constant 0 : index
    %c192 = arith.constant 192 : index
    %193 = vector.load %arg11[%c0_70, %c192] : memref<8x256xf32, #tpu.memory_space<vmem>>, vector<8x32xf32>
    tpu.vector_store %arg11[%c0_70, %c192], %192 {strides = array<i32>} : memref<8x256xf32, #tpu.memory_space<vmem>>, vector<8x32xf32>,
    %c0_71 = arith.constant 0 : index
    %c192_72 = arith.constant 192 : index
    %194 = vector.load %arg12[%c0_71, %c192_72] : memref<8x256xf32, #tpu.memory_space<vmem>>, vector<8x32xf32>
    tpu.vector_store %arg12[%c0_71, %c192_72], %185 {strides = array<i32>} : memref<8x256xf32, #tpu.memory_space<vmem>>, vector<8x32xf32>,
    %195 = vector.extract_strided_slice %17 {offsets = [56, 0], sizes = [8, 128], strides = [1, 1]} : vector<64x128xf32> to vector<8x128xf32>
    %c0_73 = arith.constant 0 : index
    %c0_74 = arith.constant 0 : index
    %196 = vector.load %arg4[%c0_73, %c0_74] : memref<32x128xf32, #tpu.memory_space<vmem>>, vector<32x128xf32>
    %cst_75 = arith.constant dense<0.000000e+00> : vector<8x128xf32>
    %197 = tpu.matmul %192, %196, %cst_75 {dimension_numbers = #tpu.dot_dimension_numbers<[1], [0], [0], [1], [0, 0, 1, 1], [], []>} : vector<8x32xf32>, vector<32x128xf32>, vector<8x128xf32> -> vector<8x128xf32>
    %198 = arith.addf %195, %197 : vector<8x128xf32>
    %199 = vector.extract_strided_slice %198 {offsets = [0, 0], sizes = [8, 32], strides = [1, 1]} : vector<8x128xf32> to vector<8x32xf32>
    %200 = vector.extract_strided_slice %198 {offsets = [0, 32], sizes = [8, 32], strides = [1, 1]} : vector<8x128xf32> to vector<8x32xf32>
    %201 = vector.extract_strided_slice %198 {offsets = [0, 64], sizes = [8, 32], strides = [1, 1]} : vector<8x128xf32> to vector<8x32xf32>
    %202 = arith.negf %199 : vector<8x32xf32>
    %203 = math.exp %202 : vector<8x32xf32>
    %cst_76 = arith.constant 1.000000e+00 : f32
    %204 = vector.broadcast %cst_76 : f32 to vector<8x32xf32>
    %205 = arith.addf %204, %203 : vector<8x32xf32>
    %206 = arith.divf %204, %205 : vector<8x32xf32>
    %207 = arith.mulf %206, %185 : vector<8x32xf32>
    %208 = math.tanh %201 : vector<8x32xf32>
    %209 = arith.mulf %10, %208 : vector<8x32xf32>
    %210 = arith.addf %207, %209 : vector<8x32xf32>
    %211 = arith.negf %200 : vector<8x32xf32>
    %212 = math.exp %211 : vector<8x32xf32>
    %cst_77 = arith.constant 1.000000e+00 : f32
    %213 = vector.broadcast %cst_77 : f32 to vector<8x32xf32>
    %214 = arith.addf %213, %212 : vector<8x32xf32>
    %215 = arith.divf %213, %214 : vector<8x32xf32>
    %216 = math.tanh %210 : vector<8x32xf32>
    %217 = arith.mulf %215, %216 : vector<8x32xf32>
    %c0_78 = arith.constant 0 : index
    %c224 = arith.constant 224 : index
    %218 = vector.load %arg11[%c0_78, %c224] : memref<8x256xf32, #tpu.memory_space<vmem>>, vector<8x32xf32>
    tpu.vector_store %arg11[%c0_78, %c224], %217 {strides = array<i32>} : memref<8x256xf32, #tpu.memory_space<vmem>>, vector<8x32xf32>,
    %c0_79 = arith.constant 0 : index
    %c224_80 = arith.constant 224 : index
    %219 = vector.load %arg12[%c0_79, %c224_80] : memref<8x256xf32, #tpu.memory_space<vmem>>, vector<8x32xf32>
    tpu.vector_store %arg12[%c0_79, %c224_80], %210 {strides = array<i32>} : memref<8x256xf32, #tpu.memory_space<vmem>>, vector<8x32xf32>,
    %c0_81 = arith.constant 0 : index
    %c0_82 = arith.constant 0 : index
    %220 = vector.load %arg8[%c0_81, %c0_82] : memref<32x1xf32, #tpu.memory_space<vmem>>, vector<32x1xf32>
    %cst_83 = arith.constant dense<0.000000e+00> : vector<8x1xf32>
    %221 = tpu.matmul %217, %220, %cst_83 {dimension_numbers = #tpu.dot_dimension_numbers<[1], [0], [0], [1], [0, 0, 1, 1], [], []>} : vector<8x32xf32>, vector<32x1xf32>, vector<8x1xf32> -> vector<8x1xf32>
    %c0_84 = arith.constant 0 : index
    %c0_85 = arith.constant 0 : index
    %222 = vector.load %arg9[%c0_84, %c0_85] : memref<1x1xf32, #tpu.memory_space<vmem>>, vector<1x1xf32>
    %223 = vector.broadcast %222 : vector<1x1xf32> to vector<8x1xf32>
    %224 = arith.addf %221, %223 : vector<8x1xf32>
    %c0_86 = arith.constant 0 : index
    %c0_87 = arith.constant 0 : index
    %225 = vector.load %arg10[%c0_86, %c0_87] : memref<8x1xf32, #tpu.memory_space<vmem>>, vector<8x1xf32>
    tpu.vector_store %arg10[%c0_86, %c0_87], %224 {strides = array<i32>} : memref<8x1xf32, #tpu.memory_space<vmem>>, vector<8x1xf32>,
    return
  }
  func.func @transform_0(%arg0: i32) -> (i32, i32, i32) {
    %c0_i32 = arith.constant 0 : i32
    %c0_i32_0 = arith.constant 0 : i32
    %c0_i32_1 = arith.constant 0 : i32
    return %arg0, %c0_i32, %c0_i32_0 : i32, i32, i32
  }
  func.func @transform_1(%arg0: i32) -> (i32, i32) {
    %c0_i32 = arith.constant 0 : i32
    %c0_i32_0 = arith.constant 0 : i32
    return %arg0, %c0_i32 : i32, i32
  }
  func.func @transform_2(%arg0: i32) -> (i32, i32) {
    %c0_i32 = arith.constant 0 : i32
    %c0_i32_0 = arith.constant 0 : i32
    %c0_i32_1 = arith.constant 0 : i32
    return %c0_i32, %c0_i32_0 : i32, i32
  }
  func.func @transform_3(%arg0: i32) -> (i32, i32) {
    %c0_i32 = arith.constant 0 : i32
    %c0_i32_0 = arith.constant 0 : i32
    %c0_i32_1 = arith.constant 0 : i32
    return %c0_i32, %c0_i32_0 : i32, i32
  }
  func.func @transform_4(%arg0: i32) -> (i32, i32) {
    %c0_i32 = arith.constant 0 : i32
    %c0_i32_0 = arith.constant 0 : i32
    %c0_i32_1 = arith.constant 0 : i32
    return %c0_i32, %c0_i32_0 : i32, i32
  }
  func.func @transform_5(%arg0: i32) -> (i32, i32) {
    %c0_i32 = arith.constant 0 : i32
    %c0_i32_0 = arith.constant 0 : i32
    %c0_i32_1 = arith.constant 0 : i32
    return %c0_i32, %c0_i32_0 : i32, i32
  }
  func.func @transform_6(%arg0: i32) -> (i32, i32) {
    %c0_i32 = arith.constant 0 : i32
    %c0_i32_0 = arith.constant 0 : i32
    %c0_i32_1 = arith.constant 0 : i32
    return %c0_i32, %c0_i32_0 : i32, i32
  }
  func.func @transform_7(%arg0: i32) -> (i32, i32) {
    %c0_i32 = arith.constant 0 : i32
    %c0_i32_0 = arith.constant 0 : i32
    %c0_i32_1 = arith.constant 0 : i32
    return %c0_i32, %c0_i32_0 : i32, i32
  }
  func.func @transform_8(%arg0: i32) -> (i32, i32) {
    %c0_i32 = arith.constant 0 : i32
    %c0_i32_0 = arith.constant 0 : i32
    %c0_i32_1 = arith.constant 0 : i32
    return %c0_i32, %c0_i32_0 : i32, i32
  }
  func.func @transform_9(%arg0: i32) -> (i32, i32) {
    %c0_i32 = arith.constant 0 : i32
    %c0_i32_0 = arith.constant 0 : i32
    return %arg0, %c0_i32 : i32, i32
  }
  func.func @transform_10(%arg0: i32) -> (i32, i32) {
    %c0_i32 = arith.constant 0 : i32
    %c0_i32_0 = arith.constant 0 : i32
    return %arg0, %c0_i32 : i32, i32
  }
  func.func @transform_11(%arg0: i32) -> (i32, i32) {
    %c0_i32 = arith.constant 0 : i32
    %c0_i32_0 = arith.constant 0 : i32
    return %arg0, %c0_i32 : i32, i32
  }
}

</mosaic_0001>

<llo_original>
// kernel: tpu_custom_call.1
$region0: #{tpu_custom_call.1}
  #allocation0 [shape = 'u32[]', space=smem, size = 0x4, offset = 0x4, fixed_abs, tag = 'smem constant byte address 0x4 - core index']
  #allocation1 [shape = 'u32[144,128]{1,0:T(1,128)}', space=vmem, size = 0x12000, scoped, tag = 'internal scratch']
  #allocation2 [shape = 'f32[1,1]{1,0:T(1,128)S(1)}', space=vmem, size = 0x200, scoped, tag = 'scoped memory for tpu_custom_call.1']
  %s0 = inlined_call_operand.vmem [shape: f32[1,64,4], index: 0, kind: input, shape index: {}]
  %s1 = inlined_call_operand.vmem [shape: f32[8,5], index: 1, kind: input, shape index: {}]
  %s2 = inlined_call_operand.vmem [shape: f32[4,128], index: 2, kind: input, shape index: {}]
  %s3 = inlined_call_operand.vmem [shape: f32[32,128], index: 3, kind: input, shape index: {}]
  %s4 = inlined_call_operand.vmem [shape: f32[5,32], index: 4, kind: input, shape index: {}]
  %s5 = inlined_call_operand.vmem [shape: f32[1,128], index: 5, kind: input, shape index: {}]
  %s6 = inlined_call_operand.vmem [shape: f32[1,32], index: 6, kind: input, shape index: {}]
  %s7 = inlined_call_operand.vmem [shape: f32[32,1], index: 7, kind: input, shape index: {}]
  %s8 = inlined_call_operand.<no memory space> [shape: f32[1,1], index: 8, kind: input, shape index: {}]
  %s9 = inlined_call_operand.vmem [shape: f32[8,1], index: 9, kind: output, shape index: {0}]
  %s10 = inlined_call_operand.hbm [shape: f32[8,256], index: 10, kind: output, shape index: {1}]
  %s11 = inlined_call_operand.hbm [shape: f32[8,256], index: 11, kind: output, shape index: {2}]
  %12 = xla_tuple %s9, %s10, %s11
  %s13 = sld [smem:[#allocation0]]
  $region62: #{tpu_custom_call.1} parent=0
    _
  %s15 = ssub.s32 1, %s13
  %s16 = scalar_select 0, %s15, %s13
  %v17 = vstv %s8
  %18 = vst [vmem:[#allocation2] sm:$0x1] %v17
  $region1: #{tpu_custom_call.1} parent=0
    #allocation3 [shape = 'u8[8192]{0}', space=vmem, size = 0x2000, scoped, tag = 'output window, operand 1, single buffered']
    #allocation4 [shape = 's32[1]{0}', space=sflag, size = 0x4, scoped, tag = 'scoped memory for tpu_custom_call.1']
    #allocation5 [shape = 'u8[8192]{0}', space=vmem, size = 0x2000, scoped, tag = 'output window, operand 2, single buffered']
    #allocation6 [shape = 's32[1]{0}', space=sflag, size = 0x4, scoped, tag = 'scoped memory for tpu_custom_call.1']
    %19 = vsyncpa [#allocation4], 0
    %20 = vsyncpa [#allocation6], 0
    // Predicated region
    $region2: #{tpu_custom_call.1} parent=1 // pred_check
      _
    $region3: #{tpu_custom_call.1} parent=1 // pred_check_branch
      %22 = sbr.rel (0) target = $region5
    $region4: #{tpu_custom_call.1} parent=1 // pred_region
      _
    $region5: #{tpu_custom_call.1} parent=1 // pred_fallthru
      _
    // Predicated region
    $region6: #{tpu_custom_call.1} parent=1 // pred_check
      _
    $region7: #{tpu_custom_call.1} parent=1 // pred_check_branch
      %24 = sbr.rel (0) target = $region9
    $region8: #{tpu_custom_call.1} parent=1 // pred_region
      _
    $region9: #{tpu_custom_call.1} parent=1 // pred_fallthru
      _
    // Predicated region
    $region10: #{tpu_custom_call.1} parent=1 // pred_check
      _
    $region11: #{tpu_custom_call.1} parent=1 // pred_check_branch
      %26 = sbr.rel (0) target = $region13
    $region12: #{tpu_custom_call.1} parent=1 // pred_region
      _
    $region13: #{tpu_custom_call.1} parent=1 // pred_fallthru
      _
    // Predicated region
    $region14: #{tpu_custom_call.1} parent=1 // pred_check
      _
    $region15: #{tpu_custom_call.1} parent=1 // pred_check_branch
      %28 = sbr.rel (0) target = $region17
    $region16: #{tpu_custom_call.1} parent=1 // pred_region
      _
    $region17: #{tpu_custom_call.1} parent=1 // pred_fallthru
      _
    // Predicated region
    $region18: #{tpu_custom_call.1} parent=1 // pred_check
      _
    $region19: #{tpu_custom_call.1} parent=1 // pred_check_branch
      %30 = sbr.rel (0) target = $region21
    $region20: #{tpu_custom_call.1} parent=1 // pred_region
      _
    $region21: #{tpu_custom_call.1} parent=1 // pred_fallthru
      _
    // Predicated region
    $region22: #{tpu_custom_call.1} parent=1 // pred_check
      _
    $region23: #{tpu_custom_call.1} parent=1 // pred_check_branch
      %32 = sbr.rel (0) target = $region25
    $region24: #{tpu_custom_call.1} parent=1 // pred_region
      _
    $region25: #{tpu_custom_call.1} parent=1 // pred_fallthru
      _
    // Predicated region
    $region26: #{tpu_custom_call.1} parent=1 // pred_check
      _
    $region27: #{tpu_custom_call.1} parent=1 // pred_check_branch
      %34 = sbr.rel (0) target = $region29
    $region28: #{tpu_custom_call.1} parent=1 // pred_region
      _
    $region29: #{tpu_custom_call.1} parent=1 // pred_fallthru
      _
    // Predicated region
    $region30: #{tpu_custom_call.1} parent=1 // pred_check
      _
    $region31: #{tpu_custom_call.1} parent=1 // pred_check_branch
      %36 = sbr.rel (0) target = $region33
    $region32: #{tpu_custom_call.1} parent=1 // pred_region
      _
    $region33: #{tpu_custom_call.1} parent=1 // pred_fallthru
      _
    // Predicated region
    $region34: #{tpu_custom_call.1} parent=1 // pred_check
      _
    $region35: #{tpu_custom_call.1} parent=1 // pred_check_branch
      %38 = sbr.rel (0) target = $region37
    $region36: #{tpu_custom_call.1} parent=1 // pred_region
      _
    $region37: #{tpu_custom_call.1} parent=1 // pred_fallthru
      _
    %v39 = vld [vmem:[%s1] sm:$0xff]
    %v40 = vld [vmem:[%s4] sm:$0x1f]
    %v41 = vld [vmem:[%s6] sm:$0x1]
    %v43 = vlaneseq
    %v44 = vshrl.u32 %v43, 7
    %v45 = vsub.s32 0, %v44
    %v46 = vrot.slane %v41, %v45
    %vm48 = vcmask 39936
    %v50 = vsel %vm48, %v39, 0
    %vm52 = vcmask 1044480
    %v54 = vsel %vm52, %v40, 0
    %56 = vmatprep.subr.mxu0 0.0
    %57 = vmatpush1.msra.mxu0 0.0
    %58 = vmatprep.subr.mxu0 0.0
    %59 = vmatpush1.msra.mxu0 0.0
    %60 = vmatprep.subr.mxu0 0.0
    %61 = vmatpush1.msra.mxu0 0.0
    %62 = vmatprep.subr.mxu0 0.0
    %63 = vmatpush1.msra.mxu0 0.0
    %64 = vmatprep.subr.mxu0 0.0
    %65 = vmatpush1.msra.mxu0 0.0
    %66 = vmatprep.subr.mxu0 0.0
    %67 = vmatpush1.msra.mxu0 0.0
    %68 = vmatprep.subr.mxu0 0.0
    %69 = vmatpush1.msra.mxu0 0.0
    %70 = vmatprep.subr.mxu0 0.0
    %71 = vmatpush1.msra.mxu0 0.0
    %72 = vmatprep.subr.mxu0 0.0
    %73 = vmatpush1.msra.mxu0 0.0
    %74 = vmatprep.subr.mxu0 0.0
    %75 = vmatpush1.msra.mxu0 0.0
    %76 = vmatprep.subr.mxu0 0.0
    %77 = vmatpush1.msra.mxu0 0.0
    %78 = vmatprep.subr.mxu0 0.0
    %79 = vmatpush1.msra.mxu0 0.0
    %80 = vmatprep.subr.mxu0 0.0
    %81 = vmatpush1.msra.mxu0 0.0
    %82 = vmatprep.subr.mxu0 0.0
    %83 = vmatpush1.msra.mxu0 0.0
    %84 = vmatprep.subr.mxu0 0.0
    %85 = vmatpush1.msra.mxu0 0.0
    %86 = vmatprep.subr.mxu0 0.0
    %87 = vmatpush1.msra.mxu0 %v54
    %88 = vmatprep.subr.mxu0 0.0
    %89 = vmatpush2.msra.mxu0 0.0
    %90 = vmatprep.subr.mxu0 0.0
    %91 = vmatpush2.msra.mxu0 0.0
    %92 = vmatprep.subr.mxu0 0.0
    %93 = vmatpush2.msra.mxu0 0.0
    %94 = vmatprep.subr.mxu0 0.0
    %95 = vmatpush2.msra.mxu0 0.0
    %96 = vmatprep.subr.mxu0 0.0
    %97 = vmatpush2.msra.mxu0 0.0
    %98 = vmatprep.subr.mxu0 0.0
    %99 = vmatpush2.msra.mxu0 0.0
    %100 = vmatprep.subr.mxu0 0.0
    %101 = vmatpush2.msra.mxu0 0.0
    %102 = vmatprep.subr.mxu0 0.0
    %103 = vmatpush2.msra.mxu0 0.0
    %104 = vmatprep.subr.mxu0 0.0
    %105 = vmatpush2.msra.mxu0 0.0
    %106 = vmatprep.subr.mxu0 0.0
    %107 = vmatpush2.msra.mxu0 0.0
    %108 = vmatprep.subr.mxu0 0.0
    %109 = vmatpush2.msra.mxu0 0.0
    %110 = vmatprep.subr.mxu0 0.0
    %111 = vmatpush2.msra.mxu0 0.0
    %112 = vmatprep.subr.mxu0 0.0
    %113 = vmatpush2.msra.mxu0 0.0
    %114 = vmatprep.subr.mxu0 0.0
    %115 = vmatpush2.msra.mxu0 0.0
    %116 = vmatprep.subr.mxu0 0.0
    %117 = vmatpush2.msra.mxu0 0.0
    %118 = vmatprep.subr.mxu0 0.0
    %119 = vmatpush2.msra.mxu0 0.0
    %120 = vmatprep.mubr.f32.mxu0 0.0
    %121 = vmatmul.mubr.f32.gmra.mxu0 %v50
    %v122 = vpop.f32.mrf.mxu0
    %v123 = vadd.f32 %v46, %v122
    %v124 = vpop.f32.mrf.mxu0
    %125 = vdwg.mxu0
    %v126 = vxor.u32 %v123, 2147483648
    %v127 = vmul.f32 %v126, 1.442695
    %v128 = vpow.pop %v127
    %v129 = vadd.f32 %v128, 1.0
    %v130 = vrcp.pop %v129
    %v131 = vmul.f32 1.0, %v130
    %v132 = vld [vmem:[%s0] sm:$0xff]
    %v133 = vld [vmem:[%s0 + $0x8] sm:$0xff]
    %v134 = vld [vmem:[%s0 + $0x10] sm:$0xff]
    %v135 = vld [vmem:[%s0 + $0x18] sm:$0xff]
    %v136 = vld [vmem:[%s0 + $0x20] sm:$0xff]
    %v137 = vld [vmem:[%s0 + $0x28] sm:$0xff]
    %v138 = vld [vmem:[%s0 + $0x30] sm:$0xff]
    %v139 = vld [vmem:[%s0 + $0x38] sm:$0xff]
    %v140 = vld [vmem:[%s2] sm:$0xf]
    %v141 = vld [vmem:[%s5] sm:$0x1]
    %v143 = vlaneseq
    %v144 = vshrl.u32 %v143, 7
    %v145 = vsub.s32 0, %v144
    %v146 = vrot.slane %v141, %v145
    %vm148 = vcmask 31744
    %v150 = vsel %vm148, %v132, 0
    %v153 = vsel %vm148, %v133, 0
    %v156 = vsel %vm148, %v134, 0
    %v159 = vsel %vm148, %v135, 0
    %v162 = vsel %vm148, %v136, 0
    %v165 = vsel %vm148, %v137, 0
    %v168 = vsel %vm148, %v138, 0
    %v171 = vsel %vm148, %v139, 0
    %vm173 = vcmask 1043456
    %v175 = vsel %vm173, %v140, 0
    %177 = vmatprep.subr.mxu0 0.0
    %178 = vmatpush1.msra.mxu0 0.0
    %179 = vmatprep.subr.mxu0 0.0
    %180 = vmatpush1.msra.mxu0 0.0
    %181 = vmatprep.subr.mxu0 0.0
    %182 = vmatpush1.msra.mxu0 0.0
    %183 = vmatprep.subr.mxu0 0.0
    %184 = vmatpush1.msra.mxu0 0.0
    %185 = vmatprep.subr.mxu0 0.0
    %186 = vmatpush1.msra.mxu0 0.0
    %187 = vmatprep.subr.mxu0 0.0
    %188 = vmatpush1.msra.mxu0 0.0
    %189 = vmatprep.subr.mxu0 0.0
    %190 = vmatpush1.msra.mxu0 0.0
    %191 = vmatprep.subr.mxu0 0.0
    %192 = vmatpush1.msra.mxu0 0.0
    %193 = vmatprep.subr.mxu0 0.0
    %194 = vmatpush1.msra.mxu0 0.0
    %195 = vmatprep.subr.mxu0 0.0
    %196 = vmatpush1.msra.mxu0 0.0
    %197 = vmatprep.subr.mxu0 0.0
    %198 = vmatpush1.msra.mxu0 0.0
    %199 = vmatprep.subr.mxu0 0.0
    %200 = vmatpush1.msra.mxu0 0.0
    %201 = vmatprep.subr.mxu0 0.0
    %202 = vmatpush1.msra.mxu0 0.0
    %203 = vmatprep.subr.mxu0 0.0
    %204 = vmatpush1.msra.mxu0 0.0
    %205 = vmatprep.subr.mxu0 0.0
    %206 = vmatpush1.msra.mxu0 0.0
    %207 = vmatprep.subr.mxu0 0.0
    %208 = vmatpush1.msra.mxu0 %v175
    %209 = vmatprep.subr.mxu0 0.0
    %210 = vmatpush2.msra.mxu0 0.0
    %211 = vmatprep.subr.mxu0 0.0
    %212 = vmatpush2.msra.mxu0 0.0
    %213 = vmatprep.subr.mxu0 0.0
    %214 = vmatpush2.msra.mxu0 0.0
    %215 = vmatprep.subr.mxu0 0.0
    %216 = vmatpush2.msra.mxu0 0.0
    %217 = vmatprep.subr.mxu0 0.0
    %218 = vmatpush2.msra.mxu0 0.0
    %219 = vmatprep.subr.mxu0 0.0
    %220 = vmatpush2.msra.mxu0 0.0
    %221 = vmatprep.subr.mxu0 0.0
    %222 = vmatpush2.msra.mxu0 0.0
    %223 = vmatprep.subr.mxu0 0.0
    %224 = vmatpush2.msra.mxu0 0.0
    %225 = vmatprep.subr.mxu0 0.0
    %226 = vmatpush2.msra.mxu0 0.0
    %227 = vmatprep.subr.mxu0 0.0
    %228 = vmatpush2.msra.mxu0 0.0
    %229 = vmatprep.subr.mxu0 0.0
    %230 = vmatpush2.msra.mxu0 0.0
    %231 = vmatprep.subr.mxu0 0.0
    %232 = vmatpush2.msra.mxu0 0.0
    %233 = vmatprep.subr.mxu0 0.0
    %234 = vmatpush2.msra.mxu0 0.0
    %235 = vmatprep.subr.mxu0 0.0
    %236 = vmatpush2.msra.mxu0 0.0
    %237 = vmatprep.subr.mxu0 0.0
    %238 = vmatpush2.msra.mxu0 0.0
    %239 = vmatprep.subr.mxu0 0.0
    %240 = vmatpush2.msra.mxu0 0.0
    %241 = vmatprep.mubr.f32.mxu0 0.0
    %242 = vmatmul.mubr.f32.gmra.mxu0 %v150
    %v243 = vpop.f32.mrf.mxu0
    %v244 = vadd.f32 %v146, %v243
    %v245 = vpop.f32.mrf.mxu0
    %246 = vmatprep.mubr.f32.mxu0 0.0
    %247 = vmatmul.mubr.f32.gmra.mxu0 %v153
    %v248 = vpop.f32.mrf.mxu0
    %v249 = vadd.f32 %v146, %v248
    %v250 = vpop.f32.mrf.mxu0
    %251 = vmatprep.mubr.f32.mxu0 0.0
    %252 = vmatmul.mubr.f32.gmra.mxu0 %v156
    %v253 = vpop.f32.mrf.mxu0
    %v254 = vadd.f32 %v146, %v253
    %v255 = vpop.f32.mrf.mxu0
    %256 = vmatprep.mubr.f32.mxu0 0.0
    %257 = vmatmul.mubr.f32.gmra.mxu0 %v159
    %v258 = vpop.f32.mrf.mxu0
    %v259 = vadd.f32 %v146, %v258
    %v260 = vpop.f32.mrf.mxu0
    %261 = vmatprep.mubr.f32.mxu0 0.0
    %262 = vmatmul.mubr.f32.gmra.mxu0 %v162
    %v263 = vpop.f32.mrf.mxu0
    %v264 = vadd.f32 %v146, %v263
    %v265 = vpop.f32.mrf.mxu0
    %266 = vmatprep.mubr.f32.mxu0 0.0
    %267 = vmatmul.mubr.f32.gmra.mxu0 %v165
    %v268 = vpop.f32.mrf.mxu0
    %v269 = vadd.f32 %v146, %v268
    %v270 = vpop.f32.mrf.mxu0
    %271 = vmatprep.mubr.f32.mxu0 0.0
    %272 = vmatmul.mubr.f32.gmra.mxu0 %v168
    %v273 = vpop.f32.mrf.mxu0
    %v274 = vadd.f32 %v146, %v273
    %v275 = vpop.f32.mrf.mxu0
    %276 = vmatprep.mubr.f32.mxu0 0.0
    %277 = vmatmul.mubr.f32.gmra.mxu0 %v171
    %v278 = vpop.f32.mrf.mxu0
    %v279 = vadd.f32 %v146, %v278
    %v280 = vpop.f32.mrf.mxu0
    %281 = vdwg.mxu0
    %v282 = vld [vmem:[%s3] sm:$0xff]
    %v283 = vld [vmem:[%s3 + $0x8] sm:$0xff]
    %v284 = vld [vmem:[%s3 + $0x10] sm:$0xff]
    %v285 = vld [vmem:[%s3 + $0x18] sm:$0xff]
    %vm286 = vcmask 261120
    %v288 = vsel %vm286, 0.0, 0
    %290 = vmatprep.subr.mxu0 0.0
    %291 = vmatpush1.msra.mxu0 0.0
    %292 = vmatprep.subr.mxu0 0.0
    %293 = vmatpush1.msra.mxu0 0.0
    %294 = vmatprep.subr.mxu0 0.0
    %295 = vmatpush1.msra.mxu0 0.0
    %296 = vmatprep.subr.mxu0 0.0
    %297 = vmatpush1.msra.mxu0 0.0
    %298 = vmatprep.subr.mxu0 0.0
    %299 = vmatpush1.msra.mxu0 0.0
    %300 = vmatprep.subr.mxu0 0.0
    %301 = vmatpush1.msra.mxu0 0.0
    %302 = vmatprep.subr.mxu0 0.0
    %303 = vmatpush1.msra.mxu0 0.0
    %304 = vmatprep.subr.mxu0 0.0
    %305 = vmatpush1.msra.mxu0 0.0
    %306 = vmatprep.subr.mxu0 0.0
    %307 = vmatpush1.msra.mxu0 0.0
    %308 = vmatprep.subr.mxu0 0.0
    %309 = vmatpush1.msra.mxu0 0.0
    %310 = vmatprep.subr.mxu0 0.0
    %311 = vmatpush1.msra.mxu0 0.0
    %312 = vmatprep.subr.mxu0 0.0
    %313 = vmatpush1.msra.mxu0 0.0
    %314 = vmatprep.subr.mxu0 0.0
    %315 = vmatpush1.msra.mxu0 %v285
    %316 = vmatprep.subr.mxu0 0.0
    %317 = vmatpush1.msra.mxu0 %v284
    %318 = vmatprep.subr.mxu0 0.0
    %319 = vmatpush1.msra.mxu0 %v283
    %320 = vmatprep.subr.mxu0 0.0
    %321 = vmatpush1.msra.mxu0 %v282
    %322 = vmatprep.subr.mxu0 0.0
    %323 = vmatpush2.msra.mxu0 0.0
    %324 = vmatprep.subr.mxu0 0.0
    %325 = vmatpush2.msra.mxu0 0.0
    %326 = vmatprep.subr.mxu0 0.0
    %327 = vmatpush2.msra.mxu0 0.0
    %328 = vmatprep.subr.mxu0 0.0
    %329 = vmatpush2.msra.mxu0 0.0
    %330 = vmatprep.subr.mxu0 0.0
    %331 = vmatpush2.msra.mxu0 0.0
    %332 = vmatprep.subr.mxu0 0.0
    %333 = vmatpush2.msra.mxu0 0.0
    %334 = vmatprep.subr.mxu0 0.0
    %335 = vmatpush2.msra.mxu0 0.0
    %336 = vmatprep.subr.mxu0 0.0
    %337 = vmatpush2.msra.mxu0 0.0
    %338 = vmatprep.subr.mxu0 0.0
    %339 = vmatpush2.msra.mxu0 0.0
    %340 = vmatprep.subr.mxu0 0.0
    %341 = vmatpush2.msra.mxu0 0.0
    %342 = vmatprep.subr.mxu0 0.0
    %343 = vmatpush2.msra.mxu0 0.0
    %344 = vmatprep.subr.mxu0 0.0
    %345 = vmatpush2.msra.mxu0 0.0
    %346 = vmatprep.subr.mxu0 0.0
    %347 = vmatpush2.msra.mxu0 0.0
    %348 = vmatprep.subr.mxu0 0.0
    %349 = vmatpush2.msra.mxu0 0.0
    %350 = vmatprep.subr.mxu0 0.0
    %351 = vmatpush2.msra.mxu0 0.0
    %352 = vmatprep.subr.mxu0 0.0
    %353 = vmatpush2.msra.mxu0 0.0
    %354 = vmatprep.mubr.f32.mxu0 0.0
    %355 = vmatmul.mubr.f32.gmra.mxu0 %v288
    %v356 = vpop.f32.mrf.mxu0
    %v357 = vadd.f32 0.0, %v356
    %v358 = vpop.f32.mrf.mxu0
    %359 = vdwg.mxu0
    %v360 = vadd.f32 %v244, %v357
    %v361 = vxor.u32 %v360, 2147483648
    %v362 = vmul.f32 %v361, 1.442695
    %v363 = vpow.pop %v362
    %v364 = vadd.f32 %v363, 1.0
    %v365 = vrcp.pop %v364
    %v366 = vmul.f32 1.0, %v365
    %v367 = vmul.f32 %v366, 0.0
    %v368 = vtanh.pop %v360
    %370 = vrot.lane.b32.xlu0 %v368, 64
    %v371 = vpop.permute.xlu0 %370
    %v373 = vmul.f32 %v131, %v371
    %v374 = vadd.f32 %v367, %v373
    %v375 = vtanh.pop %v374
    %377 = vrot.lane.b32.xlu0 %v375, 32
    %v378 = vpop.permute.xlu0 %377
    %v380 = vmul.f32 %v366, %v378
    %382 = vrot.lane.b32.xlu0 %v380, 96
    %v383 = vpop.permute.xlu0 %382
    %385 = vst.msk [vmem:[#allocation3] sm:$0xff] %vm286, %v383
    %386 = vst.msk [vmem:[#allocation5] sm:$0xff] %vm286, %v374
    %v387 = vld [vmem:[%s3] sm:$0xff]
    %v388 = vld [vmem:[%s3 + $0x8] sm:$0xff]
    %v389 = vld [vmem:[%s3 + $0x10] sm:$0xff]
    %v390 = vld [vmem:[%s3 + $0x18] sm:$0xff]
    %v391 = vsel %vm286, %v383, 0
    %393 = vmatprep.subr.mxu0 0.0
    %394 = vmatpush1.msra.mxu0 0.0
    %395 = vmatprep.subr.mxu0 0.0
    %396 = vmatpush1.msra.mxu0 0.0
    %397 = vmatprep.subr.mxu0 0.0
    %398 = vmatpush1.msra.mxu0 0.0
    %399 = vmatprep.subr.mxu0 0.0
    %400 = vmatpush1.msra.mxu0 0.0
    %401 = vmatprep.subr.mxu0 0.0
    %402 = vmatpush1.msra.mxu0 0.0
    %403 = vmatprep.subr.mxu0 0.0
    %404 = vmatpush1.msra.mxu0 0.0
    %405 = vmatprep.subr.mxu0 0.0
    %406 = vmatpush1.msra.mxu0 0.0
    %407 = vmatprep.subr.mxu0 0.0
    %408 = vmatpush1.msra.mxu0 0.0
    %409 = vmatprep.subr.mxu0 0.0
    %410 = vmatpush1.msra.mxu0 0.0
    %411 = vmatprep.subr.mxu0 0.0
    %412 = vmatpush1.msra.mxu0 0.0
    %413 = vmatprep.subr.mxu0 0.0
    %414 = vmatpush1.msra.mxu0 0.0
    %415 = vmatprep.subr.mxu0 0.0
    %416 = vmatpush1.msra.mxu0 0.0
    %417 = vmatprep.subr.mxu0 0.0
    %418 = vmatpush1.msra.mxu0 %v390
    %419 = vmatprep.subr.mxu0 0.0
    %420 = vmatpush1.msra.mxu0 %v389
    %421 = vmatprep.subr.mxu0 0.0
    %422 = vmatpush1.msra.mxu0 %v388
    %423 = vmatprep.subr.mxu0 0.0
    %424 = vmatpush1.msra.mxu0 %v387
    %425 = vmatprep.subr.mxu0 0.0
    %426 = vmatpush2.msra.mxu0 0.0
    %427 = vmatprep.subr.mxu0 0.0
    %428 = vmatpush2.msra.mxu0 0.0
    %429 = vmatprep.subr.mxu0 0.0
    %430 = vmatpush2.msra.mxu0 0.0
    %431 = vmatprep.subr.mxu0 0.0
    %432 = vmatpush2.msra.mxu0 0.0
    %433 = vmatprep.subr.mxu0 0.0
    %434 = vmatpush2.msra.mxu0 0.0
    %435 = vmatprep.subr.mxu0 0.0
    %436 = vmatpush2.msra.mxu0 0.0
    %437 = vmatprep.subr.mxu0 0.0
    %438 = vmatpush2.msra.mxu0 0.0
    %439 = vmatprep.subr.mxu0 0.0
    %440 = vmatpush2.msra.mxu0 0.0
    %441 = vmatprep.subr.mxu0 0.0
    %442 = vmatpush2.msra.mxu0 0.0
    %443 = vmatprep.subr.mxu0 0.0
    %444 = vmatpush2.msra.mxu0 0.0
    %445 = vmatprep.subr.mxu0 0.0
    %446 = vmatpush2.msra.mxu0 0.0
    %447 = vmatprep.subr.mxu0 0.0
    %448 = vmatpush2.msra.mxu0 0.0
    %449 = vmatprep.subr.mxu0 0.0
    %450 = vmatpush2.msra.mxu0 0.0
    %451 = vmatprep.subr.mxu0 0.0
    %452 = vmatpush2.msra.mxu0 0.0
    %453 = vmatprep.subr.mxu0 0.0
    %454 = vmatpush2.msra.mxu0 0.0
    %455 = vmatprep.subr.mxu0 0.0
    %456 = vmatpush2.msra.mxu0 0.0
    %457 = vmatprep.mubr.f32.mxu0 0.0
    %458 = vmatmul.mubr.f32.gmra.mxu0 %v391
    %v459 = vpop.f32.mrf.mxu0
    %v460 = vadd.f32 0.0, %v459
    %v461 = vpop.f32.mrf.mxu0
    %462 = vdwg.mxu0
    %v463 = vadd.f32 %v249, %v460
    %v464 = vxor.u32 %v463, 2147483648
    %v465 = vmul.f32 %v464, 1.442695
    %v466 = vpow.pop %v465
    %v467 = vadd.f32 %v466, 1.0
    %v468 = vrcp.pop %v467
    %v469 = vmul.f32 1.0, %v468
    %v470 = vmul.f32 %v469, %v374
    %v471 = vtanh.pop %v463
    %473 = vrot.lane.b32.xlu0 %v471, 64
    %v474 = vpop.permute.xlu0 %473
    %v476 = vmul.f32 %v131, %v474
    %v477 = vadd.f32 %v470, %v476
    %v478 = vtanh.pop %v477
    %480 = vrot.lane.b32.xlu0 %v478, 32
    %v481 = vpop.permute.xlu0 %480
    %v483 = vmul.f32 %v469, %v481
    %vm484 = vcmask 523520
    %485 = vst.msk [vmem:[#allocation3] sm:$0xff] %vm484, %v483
    %487 = vrot.lane.b32.xlu0 %v477, 32
    %v488 = vpop.permute.xlu0 %487
    %490 = vst.msk [vmem:[#allocation5] sm:$0xff] %vm484, %v488
    %v491 = vld [vmem:[%s3] sm:$0xff]
    %v492 = vld [vmem:[%s3 + $0x8] sm:$0xff]
    %v493 = vld [vmem:[%s3 + $0x10] sm:$0xff]
    %v494 = vld [vmem:[%s3 + $0x18] sm:$0xff]
    %496 = vrot.lane.b32.xlu0 %v483, 96
    %v497 = vpop.permute.xlu0 %496
    %v498 = vsel %vm286, %v497, 0
    %500 = vmatprep.subr.mxu0 0.0
    %501 = vmatpush1.msra.mxu0 0.0
    %502 = vmatprep.subr.mxu0 0.0
    %503 = vmatpush1.msra.mxu0 0.0
    %504 = vmatprep.subr.mxu0 0.0
    %505 = vmatpush1.msra.mxu0 0.0
    %506 = vmatprep.subr.mxu0 0.0
    %507 = vmatpush1.msra.mxu0 0.0
    %508 = vmatprep.subr.mxu0 0.0
    %509 = vmatpush1.msra.mxu0 0.0
    %510 = vmatprep.subr.mxu0 0.0
    %511 = vmatpush1.msra.mxu0 0.0
    %512 = vmatprep.subr.mxu0 0.0
    %513 = vmatpush1.msra.mxu0 0.0
    %514 = vmatprep.subr.mxu0 0.0
    %515 = vmatpush1.msra.mxu0 0.0
    %516 = vmatprep.subr.mxu0 0.0
    %517 = vmatpush1.msra.mxu0 0.0
    %518 = vmatprep.subr.mxu0 0.0
    %519 = vmatpush1.msra.mxu0 0.0
    %520 = vmatprep.subr.mxu0 0.0
    %521 = vmatpush1.msra.mxu0 0.0
    %522 = vmatprep.subr.mxu0 0.0
    %523 = vmatpush1.msra.mxu0 0.0
    %524 = vmatprep.subr.mxu0 0.0
    %525 = vmatpush1.msra.mxu0 %v494
    %526 = vmatprep.subr.mxu0 0.0
    %527 = vmatpush1.msra.mxu0 %v493
    %528 = vmatprep.subr.mxu0 0.0
    %529 = vmatpush1.msra.mxu0 %v492
    %530 = vmatprep.subr.mxu0 0.0
    %531 = vmatpush1.msra.mxu0 %v491
    %532 = vmatprep.subr.mxu0 0.0
    %533 = vmatpush2.msra.mxu0 0.0
    %534 = vmatprep.subr.mxu0 0.0
    %535 = vmatpush2.msra.mxu0 0.0
    %536 = vmatprep.subr.mxu0 0.0
    %537 = vmatpush2.msra.mxu0 0.0
    %538 = vmatprep.subr.mxu0 0.0
    %539 = vmatpush2.msra.mxu0 0.0
    %540 = vmatprep.subr.mxu0 0.0
    %541 = vmatpush2.msra.mxu0 0.0
    %542 = vmatprep.subr.mxu0 0.0
    %543 = vmatpush2.msra.mxu0 0.0
    %544 = vmatprep.subr.mxu0 0.0
    %545 = vmatpush2.msra.mxu0 0.0
    %546 = vmatprep.subr.mxu0 0.0
    %547 = vmatpush2.msra.mxu0 0.0
    %548 = vmatprep.subr.mxu0 0.0
    %549 = vmatpush2.msra.mxu0 0.0
    %550 = vmatprep.subr.mxu0 0.0
    %551 = vmatpush2.msra.mxu0 0.0
    %552 = vmatprep.subr.mxu0 0.0
    %553 = vmatpush2.msra.mxu0 0.0
    %554 = vmatprep.subr.mxu0 0.0
    %555 = vmatpush2.msra.mxu0 0.0
    %556 = vmatprep.subr.mxu0 0.0
    %557 = vmatpush2.msra.mxu0 0.0
    %558 = vmatprep.subr.mxu0 0.0
    %559 = vmatpush2.msra.mxu0 0.0
    %560 = vmatprep.subr.mxu0 0.0
    %561 = vmatpush2.msra.mxu0 0.0
    %562 = vmatprep.subr.mxu0 0.0
    %563 = vmatpush2.msra.mxu0 0.0
    %564 = vmatprep.mubr.f32.mxu0 0.0
    %565 = vmatmul.mubr.f32.gmra.mxu0 %v498
    %v566 = vpop.f32.mrf.mxu0
    %v567 = vadd.f32 0.0, %v566
    %v568 = vpop.f32.mrf.mxu0
    %569 = vdwg.mxu0
    %v570 = vadd.f32 %v254, %v567
    %v571 = vxor.u32 %v570, 2147483648
    %v572 = vmul.f32 %v571, 1.442695
    %v573 = vpow.pop %v572
    %v574 = vadd.f32 %v573, 1.0
    %v575 = vrcp.pop %v574
    %v576 = vmul.f32 1.0, %v575
    %v577 = vmul.f32 %v576, %v477
    %v578 = vtanh.pop %v570
    %580 = vrot.lane.b32.xlu0 %v578, 64
    %v581 = vpop.permute.xlu0 %580
    %v583 = vmul.f32 %v131, %v581
    %v584 = vadd.f32 %v577, %v583
    %v585 = vtanh.pop %v584
    %587 = vrot.lane.b32.xlu0 %v585, 32
    %v588 = vpop.permute.xlu0 %587
    %v590 = vmul.f32 %v576, %v588
    %592 = vrot.lane.b32.xlu0 %v590, 32
    %v593 = vpop.permute.xlu0 %592
    %vm595 = vcmask 785920
    %596 = vst.msk [vmem:[#allocation3] sm:$0xff] %vm595, %v593
    %598 = vrot.lane.b32.xlu0 %v584, 64
    %v599 = vpop.permute.xlu0 %598
    %601 = vst.msk [vmem:[#allocation5] sm:$0xff] %vm595, %v599
    %v602 = vld [vmem:[%s3] sm:$0xff]
    %v603 = vld [vmem:[%s3 + $0x8] sm:$0xff]
    %v604 = vld [vmem:[%s3 + $0x10] sm:$0xff]
    %v605 = vld [vmem:[%s3 + $0x18] sm:$0xff]
    %606 = vrot.lane.b32.xlu0 %v590, 96
    %v607 = vpop.permute.xlu0 %606
    %v608 = vsel %vm286, %v607, 0
    %610 = vmatprep.subr.mxu0 0.0
    %611 = vmatpush1.msra.mxu0 0.0
    %612 = vmatprep.subr.mxu0 0.0
    %613 = vmatpush1.msra.mxu0 0.0
    %614 = vmatprep.subr.mxu0 0.0
    %615 = vmatpush1.msra.mxu0 0.0
    %616 = vmatprep.subr.mxu0 0.0
    %617 = vmatpush1.msra.mxu0 0.0
    %618 = vmatprep.subr.mxu0 0.0
    %619 = vmatpush1.msra.mxu0 0.0
    %620 = vmatprep.subr.mxu0 0.0
    %621 = vmatpush1.msra.mxu0 0.0
    %622 = vmatprep.subr.mxu0 0.0
    %623 = vmatpush1.msra.mxu0 0.0
    %624 = vmatprep.subr.mxu0 0.0
    %625 = vmatpush1.msra.mxu0 0.0
    %626 = vmatprep.subr.mxu0 0.0
    %627 = vmatpush1.msra.mxu0 0.0
    %628 = vmatprep.subr.mxu0 0.0
    %629 = vmatpush1.msra.mxu0 0.0
    %630 = vmatprep.subr.mxu0 0.0
    %631 = vmatpush1.msra.mxu0 0.0
    %632 = vmatprep.subr.mxu0 0.0
    %633 = vmatpush1.msra.mxu0 0.0
    %634 = vmatprep.subr.mxu0 0.0
    %635 = vmatpush1.msra.mxu0 %v605
    %636 = vmatprep.subr.mxu0 0.0
    %637 = vmatpush1.msra.mxu0 %v604
    %638 = vmatprep.subr.mxu0 0.0
    %639 = vmatpush1.msra.mxu0 %v603
    %640 = vmatprep.subr.mxu0 0.0
    %641 = vmatpush1.msra.mxu0 %v602
    %642 = vmatprep.subr.mxu0 0.0
    %643 = vmatpush2.msra.mxu0 0.0
    %644 = vmatprep.subr.mxu0 0.0
    %645 = vmatpush2.msra.mxu0 0.0
    %646 = vmatprep.subr.mxu0 0.0
    %647 = vmatpush2.msra.mxu0 0.0
    %648 = vmatprep.subr.mxu0 0.0
    %649 = vmatpush2.msra.mxu0 0.0
    %650 = vmatprep.subr.mxu0 0.0
    %651 = vmatpush2.msra.mxu0 0.0
    %652 = vmatprep.subr.mxu0 0.0
    %653 = vmatpush2.msra.mxu0 0.0
    %654 = vmatprep.subr.mxu0 0.0
    %655 = vmatpush2.msra.mxu0 0.0
    %656 = vmatprep.subr.mxu0 0.0
    %657 = vmatpush2.msra.mxu0 0.0
    %658 = vmatprep.subr.mxu0 0.0
    %659 = vmatpush2.msra.mxu0 0.0
    %660 = vmatprep.subr.mxu0 0.0
    %661 = vmatpush2.msra.mxu0 0.0
    %662 = vmatprep.subr.mxu0 0.0
    %663 = vmatpush2.msra.mxu0 0.0
    %664 = vmatprep.subr.mxu0 0.0
    %665 = vmatpush2.msra.mxu0 0.0
    %666 = vmatprep.subr.mxu0 0.0
    %667 = vmatpush2.msra.mxu0 0.0
    %668 = vmatprep.subr.mxu0 0.0
    %669 = vmatpush2.msra.mxu0 0.0
    %670 = vmatprep.subr.mxu0 0.0
    %671 = vmatpush2.msra.mxu0 0.0
    %672 = vmatprep.subr.mxu0 0.0
    %673 = vmatpush2.msra.mxu0 0.0
    %674 = vmatprep.mubr.f32.mxu0 0.0
    %675 = vmatmul.mubr.f32.gmra.mxu0 %v608
    %v676 = vpop.f32.mrf.mxu0
    %v677 = vadd.f32 0.0, %v676
    %v678 = vpop.f32.mrf.mxu0
    %679 = vdwg.mxu0
    %v680 = vadd.f32 %v259, %v677
    %v681 = vxor.u32 %v680, 2147483648
    %v682 = vmul.f32 %v681, 1.442695
    %v683 = vpow.pop %v682
    %v684 = vadd.f32 %v683, 1.0
    %v685 = vrcp.pop %v684
    %v686 = vmul.f32 1.0, %v685
    %v687 = vmul.f32 %v686, %v584
    %v688 = vtanh.pop %v680
    %690 = vrot.lane.b32.xlu0 %v688, 64
    %v691 = vpop.permute.xlu0 %690
    %v693 = vmul.f32 %v131, %v691
    %v694 = vadd.f32 %v687, %v693
    %v695 = vtanh.pop %v694
    %697 = vrot.lane.b32.xlu0 %v695, 32
    %v698 = vpop.permute.xlu0 %697
    %v700 = vmul.f32 %v686, %v698
    %702 = vrot.lane.b32.xlu0 %v700, 64
    %v703 = vpop.permute.xlu0 %702
    %vm705 = vcmask 1048320
    %706 = vst.msk [vmem:[#allocation3] sm:$0xff] %vm705, %v703
    %708 = vrot.lane.b32.xlu0 %v694, 96
    %v709 = vpop.permute.xlu0 %708
    %711 = vst.msk [vmem:[#allocation5] sm:$0xff] %vm705, %v709
    %v712 = vld [vmem:[%s3] sm:$0xff]
    %v713 = vld [vmem:[%s3 + $0x8] sm:$0xff]
    %v714 = vld [vmem:[%s3 + $0x10] sm:$0xff]
    %v715 = vld [vmem:[%s3 + $0x18] sm:$0xff]
    %716 = vrot.lane.b32.xlu0 %v700, 96
    %v717 = vpop.permute.xlu0 %716
    %v718 = vsel %vm286, %v717, 0
    %720 = vmatprep.subr.mxu0 0.0
    %721 = vmatpush1.msra.mxu0 0.0
    %722 = vmatprep.subr.mxu0 0.0
    %723 = vmatpush1.msra.mxu0 0.0
    %724 = vmatprep.subr.mxu0 0.0
    %725 = vmatpush1.msra.mxu0 0.0
    %726 = vmatprep.subr.mxu0 0.0
    %727 = vmatpush1.msra.mxu0 0.0
    %728 = vmatprep.subr.mxu0 0.0
    %729 = vmatpush1.msra.mxu0 0.0
    %730 = vmatprep.subr.mxu0 0.0
    %731 = vmatpush1.msra.mxu0 0.0
    %732 = vmatprep.subr.mxu0 0.0
    %733 = vmatpush1.msra.mxu0 0.0
    %734 = vmatprep.subr.mxu0 0.0
    %735 = vmatpush1.msra.mxu0 0.0
    %736 = vmatprep.subr.mxu0 0.0
    %737 = vmatpush1.msra.mxu0 0.0
    %738 = vmatprep.subr.mxu0 0.0
    %739 = vmatpush1.msra.mxu0 0.0
    %740 = vmatprep.subr.mxu0 0.0
    %741 = vmatpush1.msra.mxu0 0.0
    %742 = vmatprep.subr.mxu0 0.0
    %743 = vmatpush1.msra.mxu0 0.0
    %744 = vmatprep.subr.mxu0 0.0
    %745 = vmatpush1.msra.mxu0 %v715
    %746 = vmatprep.subr.mxu0 0.0
    %747 = vmatpush1.msra.mxu0 %v714
    %748 = vmatprep.subr.mxu0 0.0
    %749 = vmatpush1.msra.mxu0 %v713
    %750 = vmatprep.subr.mxu0 0.0
    %751 = vmatpush1.msra.mxu0 %v712
    %752 = vmatprep.subr.mxu0 0.0
    %753 = vmatpush2.msra.mxu0 0.0
    %754 = vmatprep.subr.mxu0 0.0
    %755 = vmatpush2.msra.mxu0 0.0
    %756 = vmatprep.subr.mxu0 0.0
    %757 = vmatpush2.msra.mxu0 0.0
    %758 = vmatprep.subr.mxu0 0.0
    %759 = vmatpush2.msra.mxu0 0.0
    %760 = vmatprep.subr.mxu0 0.0
    %761 = vmatpush2.msra.mxu0 0.0
    %762 = vmatprep.subr.mxu0 0.0
    %763 = vmatpush2.msra.mxu0 0.0
    %764 = vmatprep.subr.mxu0 0.0
    %765 = vmatpush2.msra.mxu0 0.0
    %766 = vmatprep.subr.mxu0 0.0
    %767 = vmatpush2.msra.mxu0 0.0
    %768 = vmatprep.subr.mxu0 0.0
    %769 = vmatpush2.msra.mxu0 0.0
    %770 = vmatprep.subr.mxu0 0.0
    %771 = vmatpush2.msra.mxu0 0.0
    %772 = vmatprep.subr.mxu0 0.0
    %773 = vmatpush2.msra.mxu0 0.0
    %774 = vmatprep.subr.mxu0 0.0
    %775 = vmatpush2.msra.mxu0 0.0
    %776 = vmatprep.subr.mxu0 0.0
    %777 = vmatpush2.msra.mxu0 0.0
    %778 = vmatprep.subr.mxu0 0.0
    %779 = vmatpush2.msra.mxu0 0.0
    %780 = vmatprep.subr.mxu0 0.0
    %781 = vmatpush2.msra.mxu0 0.0
    %782 = vmatprep.subr.mxu0 0.0
    %783 = vmatpush2.msra.mxu0 0.0
    %784 = vmatprep.mubr.f32.mxu0 0.0
    %785 = vmatmul.mubr.f32.gmra.mxu0 %v718
    %v786 = vpop.f32.mrf.mxu0
    %v787 = vadd.f32 0.0, %v786
    %v788 = vpop.f32.mrf.mxu0
    %789 = vdwg.mxu0
    %v790 = vadd.f32 %v264, %v787
    %v791 = vxor.u32 %v790, 2147483648
    %v792 = vmul.f32 %v791, 1.442695
    %v793 = vpow.pop %v792
    %v794 = vadd.f32 %v793, 1.0
    %v795 = vrcp.pop %v794
    %v796 = vmul.f32 1.0, %v795
    %v797 = vmul.f32 %v796, %v694
    %v798 = vtanh.pop %v790
    %800 = vrot.lane.b32.xlu0 %v798, 64
    %v801 = vpop.permute.xlu0 %800
    %v803 = vmul.f32 %v131, %v801
    %v804 = vadd.f32 %v797, %v803
    %v805 = vtanh.pop %v804
    %807 = vrot.lane.b32.xlu0 %v805, 32
    %v808 = vpop.permute.xlu0 %807
    %v810 = vmul.f32 %v796, %v808
    %812 = vrot.lane.b32.xlu0 %v810, 96
    %v813 = vpop.permute.xlu0 %812
    %815 = vst.msk [vmem:[#allocation3 + $0x8] sm:$0xff] %vm286, %v813
    %816 = vst.msk [vmem:[#allocation5 + $0x8] sm:$0xff] %vm286, %v804
    %v817 = vld [vmem:[%s3] sm:$0xff]
    %v818 = vld [vmem:[%s3 + $0x8] sm:$0xff]
    %v819 = vld [vmem:[%s3 + $0x10] sm:$0xff]
    %v820 = vld [vmem:[%s3 + $0x18] sm:$0xff]
    %v821 = vsel %vm286, %v813, 0
    %823 = vmatprep.subr.mxu0 0.0
    %824 = vmatpush1.msra.mxu0 0.0
    %825 = vmatprep.subr.mxu0 0.0
    %826 = vmatpush1.msra.mxu0 0.0
    %827 = vmatprep.subr.mxu0 0.0
    %828 = vmatpush1.msra.mxu0 0.0
    %829 = vmatprep.subr.mxu0 0.0
    %830 = vmatpush1.msra.mxu0 0.0
    %831 = vmatprep.subr.mxu0 0.0
    %832 = vmatpush1.msra.mxu0 0.0
    %833 = vmatprep.subr.mxu0 0.0
    %834 = vmatpush1.msra.mxu0 0.0
    %835 = vmatprep.subr.mxu0 0.0
    %836 = vmatpush1.msra.mxu0 0.0
    %837 = vmatprep.subr.mxu0 0.0
    %838 = vmatpush1.msra.mxu0 0.0
    %839 = vmatprep.subr.mxu0 0.0
    %840 = vmatpush1.msra.mxu0 0.0
    %841 = vmatprep.subr.mxu0 0.0
    %842 = vmatpush1.msra.mxu0 0.0
    %843 = vmatprep.subr.mxu0 0.0
    %844 = vmatpush1.msra.mxu0 0.0
    %845 = vmatprep.subr.mxu0 0.0
    %846 = vmatpush1.msra.mxu0 0.0
    %847 = vmatprep.subr.mxu0 0.0
    %848 = vmatpush1.msra.mxu0 %v820
    %849 = vmatprep.subr.mxu0 0.0
    %850 = vmatpush1.msra.mxu0 %v819
    %851 = vmatprep.subr.mxu0 0.0
    %852 = vmatpush1.msra.mxu0 %v818
    %853 = vmatprep.subr.mxu0 0.0
    %854 = vmatpush1.msra.mxu0 %v817
    %855 = vmatprep.subr.mxu0 0.0
    %856 = vmatpush2.msra.mxu0 0.0
    %857 = vmatprep.subr.mxu0 0.0
    %858 = vmatpush2.msra.mxu0 0.0
    %859 = vmatprep.subr.mxu0 0.0
    %860 = vmatpush2.msra.mxu0 0.0
    %861 = vmatprep.subr.mxu0 0.0
    %862 = vmatpush2.msra.mxu0 0.0
    %863 = vmatprep.subr.mxu0 0.0
    %864 = vmatpush2.msra.mxu0 0.0
    %865 = vmatprep.subr.mxu0 0.0
    %866 = vmatpush2.msra.mxu0 0.0
    %867 = vmatprep.subr.mxu0 0.0
    %868 = vmatpush2.msra.mxu0 0.0
    %869 = vmatprep.subr.mxu0 0.0
    %870 = vmatpush2.msra.mxu0 0.0
    %871 = vmatprep.subr.mxu0 0.0
    %872 = vmatpush2.msra.mxu0 0.0
    %873 = vmatprep.subr.mxu0 0.0
    %874 = vmatpush2.msra.mxu0 0.0
    %875 = vmatprep.subr.mxu0 0.0
    %876 = vmatpush2.msra.mxu0 0.0
    %877 = vmatprep.subr.mxu0 0.0
    %878 = vmatpush2.msra.mxu0 0.0
    %879 = vmatprep.subr.mxu0 0.0
    %880 = vmatpush2.msra.mxu0 0.0
    %881 = vmatprep.subr.mxu0 0.0
    %882 = vmatpush2.msra.mxu0 0.0
    %883 = vmatprep.subr.mxu0 0.0
    %884 = vmatpush2.msra.mxu0 0.0
    %885 = vmatprep.subr.mxu0 0.0
    %886 = vmatpush2.msra.mxu0 0.0
    %887 = vmatprep.mubr.f32.mxu0 0.0
    %888 = vmatmul.mubr.f32.gmra.mxu0 %v821
    %v889 = vpop.f32.mrf.mxu0
    %v890 = vadd.f32 0.0, %v889
    %v891 = vpop.f32.mrf.mxu0
    %892 = vdwg.mxu0
    %v893 = vadd.f32 %v269, %v890
    %v894 = vxor.u32 %v893, 2147483648
    %v895 = vmul.f32 %v894, 1.442695
    %v896 = vpow.pop %v895
    %v897 = vadd.f32 %v896, 1.0
    %v898 = vrcp.pop %v897
    %v899 = vmul.f32 1.0, %v898
    %v900 = vmul.f32 %v899, %v804
    %v901 = vtanh.pop %v893
    %903 = vrot.lane.b32.xlu0 %v901, 64
    %v904 = vpop.permute.xlu0 %903
    %v906 = vmul.f32 %v131, %v904
    %v907 = vadd.f32 %v900, %v906
    %v908 = vtanh.pop %v907
    %910 = vrot.lane.b32.xlu0 %v908, 32
    %v911 = vpop.permute.xlu0 %910
    %v913 = vmul.f32 %v899, %v911
    %914 = vst.msk [vmem:[#allocation3 + $0x8] sm:$0xff] %vm484, %v913
    %916 = vrot.lane.b32.xlu0 %v907, 32
    %v917 = vpop.permute.xlu0 %916
    %919 = vst.msk [vmem:[#allocation5 + $0x8] sm:$0xff] %vm484, %v917
    %v920 = vld [vmem:[%s3] sm:$0xff]
    %v921 = vld [vmem:[%s3 + $0x8] sm:$0xff]
    %v922 = vld [vmem:[%s3 + $0x10] sm:$0xff]
    %v923 = vld [vmem:[%s3 + $0x18] sm:$0xff]
    %925 = vrot.lane.b32.xlu0 %v913, 96
    %v926 = vpop.permute.xlu0 %925
    %v927 = vsel %vm286, %v926, 0
    %929 = vmatprep.subr.mxu0 0.0
    %930 = vmatpush1.msra.mxu0 0.0
    %931 = vmatprep.subr.mxu0 0.0
    %932 = vmatpush1.msra.mxu0 0.0
    %933 = vmatprep.subr.mxu0 0.0
    %934 = vmatpush1.msra.mxu0 0.0
    %935 = vmatprep.subr.mxu0 0.0
    %936 = vmatpush1.msra.mxu0 0.0
    %937 = vmatprep.subr.mxu0 0.0
    %938 = vmatpush1.msra.mxu0 0.0
    %939 = vmatprep.subr.mxu0 0.0
    %940 = vmatpush1.msra.mxu0 0.0
    %941 = vmatprep.subr.mxu0 0.0
    %942 = vmatpush1.msra.mxu0 0.0
    %943 = vmatprep.subr.mxu0 0.0
    %944 = vmatpush1.msra.mxu0 0.0
    %945 = vmatprep.subr.mxu0 0.0
    %946 = vmatpush1.msra.mxu0 0.0
    %947 = vmatprep.subr.mxu0 0.0
    %948 = vmatpush1.msra.mxu0 0.0
    %949 = vmatprep.subr.mxu0 0.0
    %950 = vmatpush1.msra.mxu0 0.0
    %951 = vmatprep.subr.mxu0 0.0
    %952 = vmatpush1.msra.mxu0 0.0
    %953 = vmatprep.subr.mxu0 0.0
    %954 = vmatpush1.msra.mxu0 %v923
    %955 = vmatprep.subr.mxu0 0.0
    %956 = vmatpush1.msra.mxu0 %v922
    %957 = vmatprep.subr.mxu0 0.0
    %958 = vmatpush1.msra.mxu0 %v921
    %959 = vmatprep.subr.mxu0 0.0
    %960 = vmatpush1.msra.mxu0 %v920
    %961 = vmatprep.subr.mxu0 0.0
    %962 = vmatpush2.msra.mxu0 0.0
    %963 = vmatprep.subr.mxu0 0.0
    %964 = vmatpush2.msra.mxu0 0.0
    %965 = vmatprep.subr.mxu0 0.0
    %966 = vmatpush2.msra.mxu0 0.0
    %967 = vmatprep.subr.mxu0 0.0
    %968 = vmatpush2.msra.mxu0 0.0
    %969 = vmatprep.subr.mxu0 0.0
    %970 = vmatpush2.msra.mxu0 0.0
    %971 = vmatprep.subr.mxu0 0.0
    %972 = vmatpush2.msra.mxu0 0.0
    %973 = vmatprep.subr.mxu0 0.0
    %974 = vmatpush2.msra.mxu0 0.0
    %975 = vmatprep.subr.mxu0 0.0
    %976 = vmatpush2.msra.mxu0 0.0
    %977 = vmatprep.subr.mxu0 0.0
    %978 = vmatpush2.msra.mxu0 0.0
    %979 = vmatprep.subr.mxu0 0.0
    %980 = vmatpush2.msra.mxu0 0.0
    %981 = vmatprep.subr.mxu0 0.0
    %982 = vmatpush2.msra.mxu0 0.0
    %983 = vmatprep.subr.mxu0 0.0
    %984 = vmatpush2.msra.mxu0 0.0
    %985 = vmatprep.subr.mxu0 0.0
    %986 = vmatpush2.msra.mxu0 0.0
    %987 = vmatprep.subr.mxu0 0.0
    %988 = vmatpush2.msra.mxu0 0.0
    %989 = vmatprep.subr.mxu0 0.0
    %990 = vmatpush2.msra.mxu0 0.0
    %991 = vmatprep.subr.mxu0 0.0
    %992 = vmatpush2.msra.mxu0 0.0
    %993 = vmatprep.mubr.f32.mxu0 0.0
    %994 = vmatmul.mubr.f32.gmra.mxu0 %v927
    %v995 = vpop.f32.mrf.mxu0
    %v996 = vadd.f32 0.0, %v995
    %v997 = vpop.f32.mrf.mxu0
    %998 = vdwg.mxu0
    %v999 = vadd.f32 %v274, %v996
    %v1000 = vxor.u32 %v999, 2147483648
    %v1001 = vmul.f32 %v1000, 1.442695
    %v1002 = vpow.pop %v1001
    %v1003 = vadd.f32 %v1002, 1.0
    %v1004 = vrcp.pop %v1003
    %v1005 = vmul.f32 1.0, %v1004
    %v1006 = vmul.f32 %v1005, %v907
    %v1007 = vtanh.pop %v999
    %1009 = vrot.lane.b32.xlu0 %v1007, 64
    %v1010 = vpop.permute.xlu0 %1009
    %v1012 = vmul.f32 %v131, %v1010
    %v1013 = vadd.f32 %v1006, %v1012
    %v1014 = vtanh.pop %v1013
    %1016 = vrot.lane.b32.xlu0 %v1014, 32
    %v1017 = vpop.permute.xlu0 %1016
    %v1019 = vmul.f32 %v1005, %v1017
    %1021 = vrot.lane.b32.xlu0 %v1019, 32
    %v1022 = vpop.permute.xlu0 %1021
    %1024 = vst.msk [vmem:[#allocation3 + $0x8] sm:$0xff] %vm595, %v1022
    %1026 = vrot.lane.b32.xlu0 %v1013, 64
    %v1027 = vpop.permute.xlu0 %1026
    %1029 = vst.msk [vmem:[#allocation5 + $0x8] sm:$0xff] %vm595, %v1027
    %v1030 = vld [vmem:[%s3] sm:$0xff]
    %v1031 = vld [vmem:[%s3 + $0x8] sm:$0xff]
    %v1032 = vld [vmem:[%s3 + $0x10] sm:$0xff]
    %v1033 = vld [vmem:[%s3 + $0x18] sm:$0xff]
    %1034 = vrot.lane.b32.xlu0 %v1019, 96
    %v1035 = vpop.permute.xlu0 %1034
    %v1036 = vsel %vm286, %v1035, 0
    %1038 = vmatprep.subr.mxu0 0.0
    %1039 = vmatpush1.msra.mxu0 0.0
    %1040 = vmatprep.subr.mxu0 0.0
    %1041 = vmatpush1.msra.mxu0 0.0
    %1042 = vmatprep.subr.mxu0 0.0
    %1043 = vmatpush1.msra.mxu0 0.0
    %1044 = vmatprep.subr.mxu0 0.0
    %1045 = vmatpush1.msra.mxu0 0.0
    %1046 = vmatprep.subr.mxu0 0.0
    %1047 = vmatpush1.msra.mxu0 0.0
    %1048 = vmatprep.subr.mxu0 0.0
    %1049 = vmatpush1.msra.mxu0 0.0
    %1050 = vmatprep.subr.mxu0 0.0
    %1051 = vmatpush1.msra.mxu0 0.0
    %1052 = vmatprep.subr.mxu0 0.0
    %1053 = vmatpush1.msra.mxu0 0.0
    %1054 = vmatprep.subr.mxu0 0.0
    %1055 = vmatpush1.msra.mxu0 0.0
    %1056 = vmatprep.subr.mxu0 0.0
    %1057 = vmatpush1.msra.mxu0 0.0
    %1058 = vmatprep.subr.mxu0 0.0
    %1059 = vmatpush1.msra.mxu0 0.0
    %1060 = vmatprep.subr.mxu0 0.0
    %1061 = vmatpush1.msra.mxu0 0.0
    %1062 = vmatprep.subr.mxu0 0.0
    %1063 = vmatpush1.msra.mxu0 %v1033
    %1064 = vmatprep.subr.mxu0 0.0
    %1065 = vmatpush1.msra.mxu0 %v1032
    %1066 = vmatprep.subr.mxu0 0.0
    %1067 = vmatpush1.msra.mxu0 %v1031
    %1068 = vmatprep.subr.mxu0 0.0
    %1069 = vmatpush1.msra.mxu0 %v1030
    %1070 = vmatprep.subr.mxu0 0.0
    %1071 = vmatpush2.msra.mxu0 0.0
    %1072 = vmatprep.subr.mxu0 0.0
    %1073 = vmatpush2.msra.mxu0 0.0
    %1074 = vmatprep.subr.mxu0 0.0
    %1075 = vmatpush2.msra.mxu0 0.0
    %1076 = vmatprep.subr.mxu0 0.0
    %1077 = vmatpush2.msra.mxu0 0.0
    %1078 = vmatprep.subr.mxu0 0.0
    %1079 = vmatpush2.msra.mxu0 0.0
    %1080 = vmatprep.subr.mxu0 0.0
    %1081 = vmatpush2.msra.mxu0 0.0
    %1082 = vmatprep.subr.mxu0 0.0
    %1083 = vmatpush2.msra.mxu0 0.0
    %1084 = vmatprep.subr.mxu0 0.0
    %1085 = vmatpush2.msra.mxu0 0.0
    %1086 = vmatprep.subr.mxu0 0.0
    %1087 = vmatpush2.msra.mxu0 0.0
    %1088 = vmatprep.subr.mxu0 0.0
    %1089 = vmatpush2.msra.mxu0 0.0
    %1090 = vmatprep.subr.mxu0 0.0
    %1091 = vmatpush2.msra.mxu0 0.0
    %1092 = vmatprep.subr.mxu0 0.0
    %1093 = vmatpush2.msra.mxu0 0.0
    %1094 = vmatprep.subr.mxu0 0.0
    %1095 = vmatpush2.msra.mxu0 0.0
    %1096 = vmatprep.subr.mxu0 0.0
    %1097 = vmatpush2.msra.mxu0 0.0
    %1098 = vmatprep.subr.mxu0 0.0
    %1099 = vmatpush2.msra.mxu0 0.0
    %1100 = vmatprep.subr.mxu0 0.0
    %1101 = vmatpush2.msra.mxu0 0.0
    %1102 = vmatprep.mubr.f32.mxu0 0.0
    %1103 = vmatmul.mubr.f32.gmra.mxu0 %v1036
    %v1104 = vpop.f32.mrf.mxu0
    %v1105 = vadd.f32 0.0, %v1104
    %v1106 = vpop.f32.mrf.mxu0
    %1107 = vdwg.mxu0
    %v1108 = vadd.f32 %v279, %v1105
    %v1109 = vxor.u32 %v1108, 2147483648
    %v1110 = vmul.f32 %v1109, 1.442695
    %v1111 = vpow.pop %v1110
    %v1112 = vadd.f32 %v1111, 1.0
    %v1113 = vrcp.pop %v1112
    %v1114 = vmul.f32 1.0, %v1113
    %v1115 = vmul.f32 %v1114, %v1013
    %v1116 = vtanh.pop %v1108
    %1118 = vrot.lane.b32.xlu0 %v1116, 64
    %v1119 = vpop.permute.xlu0 %1118
    %v1121 = vmul.f32 %v131, %v1119
    %v1122 = vadd.f32 %v1115, %v1121
    %v1123 = vtanh.pop %v1122
    %1125 = vrot.lane.b32.xlu0 %v1123, 32
    %v1126 = vpop.permute.xlu0 %1125
    %v1128 = vmul.f32 %v1114, %v1126
    %1130 = vrot.lane.b32.xlu0 %v1128, 64
    %v1131 = vpop.permute.xlu0 %1130
    %1133 = vst.msk [vmem:[#allocation3 + $0x8] sm:$0xff] %vm705, %v1131
    %1135 = vrot.lane.b32.xlu0 %v1122, 96
    %v1136 = vpop.permute.xlu0 %1135
    %1138 = vst.msk [vmem:[#allocation5 + $0x8] sm:$0xff] %vm705, %v1136
    %v1139 = vld [vmem:[%s7] sm:$0xff]
    %v1140 = vld [vmem:[%s7 + $0x8] sm:$0xff]
    %v1141 = vld [vmem:[%s7 + $0x10] sm:$0xff]
    %v1142 = vld [vmem:[%s7 + $0x18] sm:$0xff]
    %v1143 = vld [vmem:[#allocation2] sm:$0x1]
    %v1145 = vlaneseq
    %v1146 = vshrl.u32 %v1145, 7
    %v1147 = vsub.s32 0, %v1146
    %v1148 = vrot.slane %v1143, %v1147
    %1150 = vrot.lane.b32.xlu0 %v1128, 96
    %v1151 = vpop.permute.xlu0 %1150
    %v1152 = vsel %vm286, %v1151, 0
    %1154 = vmatprep.subr.mxu0 0.0
    %1155 = vmatpush1.msra.mxu0 0.0
    %1156 = vmatprep.subr.mxu0 0.0
    %1157 = vmatpush1.msra.mxu0 0.0
    %1158 = vmatprep.subr.mxu0 0.0
    %1159 = vmatpush1.msra.mxu0 0.0
    %1160 = vmatprep.subr.mxu0 0.0
    %1161 = vmatpush1.msra.mxu0 0.0
    %1162 = vmatprep.subr.mxu0 0.0
    %1163 = vmatpush1.msra.mxu0 0.0
    %1164 = vmatprep.subr.mxu0 0.0
    %1165 = vmatpush1.msra.mxu0 0.0
    %1166 = vmatprep.subr.mxu0 0.0
    %1167 = vmatpush1.msra.mxu0 0.0
    %1168 = vmatprep.subr.mxu0 0.0
    %1169 = vmatpush1.msra.mxu0 0.0
    %1170 = vmatprep.subr.mxu0 0.0
    %1171 = vmatpush1.msra.mxu0 0.0
    %1172 = vmatprep.subr.mxu0 0.0
    %1173 = vmatpush1.msra.mxu0 0.0
    %1174 = vmatprep.subr.mxu0 0.0
    %1175 = vmatpush1.msra.mxu0 0.0
    %1176 = vmatprep.subr.mxu0 0.0
    %1177 = vmatpush1.msra.mxu0 0.0
    %1178 = vmatprep.subr.mxu0 0.0
    %1179 = vmatpush1.msra.mxu0 %v1142
    %1180 = vmatprep.subr.mxu0 0.0
    %1181 = vmatpush1.msra.mxu0 %v1141
    %1182 = vmatprep.subr.mxu0 0.0
    %1183 = vmatpush1.msra.mxu0 %v1140
    %1184 = vmatprep.subr.mxu0 0.0
    %1185 = vmatpush1.msra.mxu0 %v1139
    %1186 = vmatprep.subr.mxu0 0.0
    %1187 = vmatpush2.msra.mxu0 0.0
    %1188 = vmatprep.subr.mxu0 0.0
    %1189 = vmatpush2.msra.mxu0 0.0
    %1190 = vmatprep.subr.mxu0 0.0
    %1191 = vmatpush2.msra.mxu0 0.0
    %1192 = vmatprep.subr.mxu0 0.0
    %1193 = vmatpush2.msra.mxu0 0.0
    %1194 = vmatprep.subr.mxu0 0.0
    %1195 = vmatpush2.msra.mxu0 0.0
    %1196 = vmatprep.subr.mxu0 0.0
    %1197 = vmatpush2.msra.mxu0 0.0
    %1198 = vmatprep.subr.mxu0 0.0
    %1199 = vmatpush2.msra.mxu0 0.0
    %1200 = vmatprep.subr.mxu0 0.0
    %1201 = vmatpush2.msra.mxu0 0.0
    %1202 = vmatprep.subr.mxu0 0.0
    %1203 = vmatpush2.msra.mxu0 0.0
    %1204 = vmatprep.subr.mxu0 0.0
    %1205 = vmatpush2.msra.mxu0 0.0
    %1206 = vmatprep.subr.mxu0 0.0
    %1207 = vmatpush2.msra.mxu0 0.0
    %1208 = vmatprep.subr.mxu0 0.0
    %1209 = vmatpush2.msra.mxu0 0.0
    %1210 = vmatprep.subr.mxu0 0.0
    %1211 = vmatpush2.msra.mxu0 0.0
    %1212 = vmatprep.subr.mxu0 0.0
    %1213 = vmatpush2.msra.mxu0 0.0
    %1214 = vmatprep.subr.mxu0 0.0
    %1215 = vmatpush2.msra.mxu0 0.0
    %1216 = vmatprep.subr.mxu0 0.0
    %1217 = vmatpush2.msra.mxu0 0.0
    %1218 = vmatprep.mubr.f32.mxu0 0.0
    %1219 = vmatmul.mubr.f32.gmra.mxu0 %v1152
    %v1220 = vpop.f32.mrf.mxu0
    %v1221 = vadd.f32 %v1148, %v1220
    %v1222 = vpop.f32.mrf.mxu0
    %1223 = vdwg.mxu0
    %vm1224 = vcmask 7168
    %1225 = vst.msk [vmem:[%s9] sm:$0xff] %vm1224, %v1221
    // Predicated region
    $region38: #{tpu_custom_call.1} parent=1 // pred_check
      _
    $region39: #{tpu_custom_call.1} parent=1 // pred_check_branch
      %1227 = sbr.rel (0) target = $region41
    $region40: #{tpu_custom_call.1} parent=1 // pred_region
      _
    $region41: #{tpu_custom_call.1} parent=1 // pred_fallthru
      _
    // Predicated region
    $region42: #{tpu_custom_call.1} parent=1 // pred_check
      _
    $region43: #{tpu_custom_call.1} parent=1 // pred_check_branch
      %1229 = sbr.rel (0) target = $region45
    $region44: #{tpu_custom_call.1} parent=1 // pred_region
      %s1231 = ssub.s32 256, 256
      %1232 = vsyncadd [#allocation4], %s1231
      %s1234 = sshll.u32 [#allocation3], 4
      %s1235 = int_to_ptr.vmem [resolvable:$true] %s1234
      %1237 = dma.vmem_to_hbm [thread:$0]  %s1235, 256, %s10, [#allocation4]
    $region45: #{tpu_custom_call.1} parent=1 // pred_fallthru
      _
    // Predicated region
    $region46: #{tpu_custom_call.1} parent=1 // pred_check
      _
    $region47: #{tpu_custom_call.1} parent=1 // pred_check_branch
      %1239 = sbr.rel (0) target = $region49
    $region48: #{tpu_custom_call.1} parent=1 // pred_region
      %s1241 = ssub.s32 256, 256
      %1242 = vsyncadd [#allocation6], %s1241
      %s1244 = sshll.u32 [#allocation5], 4
      %s1245 = int_to_ptr.vmem [resolvable:$true] %s1244
      %1247 = dma.vmem_to_hbm [thread:$0]  %s1245, 256, %s11, [#allocation6]
    $region49: #{tpu_custom_call.1} parent=1 // pred_fallthru
      _
    // Predicated region
    $region50: #{tpu_custom_call.1} parent=1 // pred_check
      _
    $region51: #{tpu_custom_call.1} parent=1 // pred_check_branch
      %1249 = sbr.rel (0) target = $region53
    $region52: #{tpu_custom_call.1} parent=1 // pred_region
      _
    $region53: #{tpu_custom_call.1} parent=1 // pred_fallthru
      _
    // Predicated region
    $region54: #{tpu_custom_call.1} parent=1 // pred_check
      _
    $region55: #{tpu_custom_call.1} parent=1 // pred_check_branch
      %1251 = sbr.rel (0) target = $region57
    $region56: #{tpu_custom_call.1} parent=1 // pred_region
      %1252 = dma.done [#allocation4], 256
    $region57: #{tpu_custom_call.1} parent=1 // pred_fallthru
      _
    // Predicated region
    $region58: #{tpu_custom_call.1} parent=1 // pred_check
      _
    $region59: #{tpu_custom_call.1} parent=1 // pred_check_branch
      %1254 = sbr.rel (0) target = $region61
    $region60: #{tpu_custom_call.1} parent=1 // pred_region
      %1255 = dma.done [#allocation6], 256
    $region61: #{tpu_custom_call.1} parent=1 // pred_fallthru
      _
    %1256 = vsyncpa [#allocation4], 1
    %1257 = vsyncpa [#allocation6], 1

</llo_original>
